<compile_context>
chip_gen: v7x
topology: tpu7x:2x2x1
jax: 0.10.0
libtpu: 0.0.40
codegen_flags: <defaults>
</compile_context>

<pallas_src>
import numpy as np
import jax
import jax.numpy as jnp
from jax.experimental import pallas as pl
from jax.experimental.pallas import tpu as pltpu


# ----------------------------------------------------------------------------- kernel
def _make_bbdm_kernel(b, c, cc, hw):
    """Kernel closure over static sizes (b batches, c latent ch, cc context ch, hw lanes/batch)."""
    k_in = c + cc  # contraction length of the surrogate denoiser

    def bbdm_kernel(
        t_ref,        # SMEM (B,)        int32 timesteps
        m_tab_ref,    # SMEM (T,)        f32   m_t schedule
        sig_tab_ref,  # SMEM (T,)        f32   sqrt(variance_t) schedule
        temb_ref,     # SMEM (T*C,)      f32   flattened time-embedding table
        w_ref,        # SMEM (C*(C+Cc),) f32   flattened [Wx | Wc] surrogate weights
        data_ref,     # VMEM (3C+Cc, B*HW) f32 stacked [x0 ; y ; noise ; ctx]
        x0r_ref,      # VMEM out (C, B*HW)     x0_recon
        loss_ref,     # VMEM out (1, 1)        sum |objective - objective_recon|
    ):
        loss_acc = jnp.zeros((1, 1), jnp.float32)

        # Static unrolled loop over the (tiny) batch: per batch the schedule
        # coefficients are plain SMEM scalars broadcast over a lane-dense (C, HW) block.
        for bi in range(b):
            cols = slice(bi * hw, (bi + 1) * hw)   # 256-lane, 128-aligned static slice
            tb = t_ref[bi]
            m = m_tab_ref[tb]
            sig = sig_tab_ref[tb]

            x0_b = data_ref[0:c, cols]             # (C, HW)
            y_b = data_ref[c:2 * c, cols]
            n_b = data_ref[2 * c:3 * c, cols]
            ctx_b = data_ref[3 * c:3 * c + cc, cols]

            # ---- q_sample (objective == 'grad') ----
            sn = sig * n_b
            x_t = (1.0 - m) * x0_b + m * y_b + sn
            objective = m * (y_b - x0_b) + sn

            # ---- surrogate denoise_fn on the VPU: unrolled scalar-broadcast FMAs ----
            rows = []
            for oc in range(c):
                acc = w_ref[oc * k_in + 0] * x_t[0:1, :]
                for k in range(1, c):
                    acc = acc + w_ref[oc * k_in + k] * x_t[k:k + 1, :]
                for k in range(cc):
                    acc = acc + w_ref[oc * k_in + c + k] * ctx_b[k:k + 1, :]
                acc = acc + temb_ref[tb * c + oc]
                rows.append(acc)
            obj_recon = jnp.concatenate(rows, axis=0)        # (C, HW)

            # ---- predict_x0_from_objective (objective == 'grad') ----
            x0r_ref[:, cols] = x_t - obj_recon

            # ---- L1 loss partial sum (mean taken in the wrapper) ----
            loss_acc = loss_acc + jnp.sum(
                jnp.abs(objective - obj_recon), axis=(0, 1), keepdims=True
            )

        loss_ref[...] = loss_acc

    return bbdm_kernel


# ----------------------------------------------------------------------------- wrapper
def brownian_bridge_forward(x0, y, context, noise, t, m_t, sigma_t, temb_flat, w_flat):
    """Returns (loss, {'loss': loss, 'x0_recon': x0_recon}) like p_losses.

    sigma_t  = sqrt(variance_t)            (precomputed once — schedule constant)
    temb_flat= temb_table.reshape(-1)      (precomputed once)
    w_flat   = concat(wx, wc, 1).reshape(-1) (precomputed once — parameter constant)
    """
    b, c, h, wd = x0.shape
    cc = context.shape[1]
    hw = h * wd
    bhw = b * hw

    # One consolidated lane-dense input slab: (B, 3C+Cc, H, W) -> (3C+Cc, B*H*W)
    stacked = jnp.concatenate([x0, y, noise, context], axis=1)
    data = jnp.transpose(stacked, (1, 0, 2, 3)).reshape(3 * c + cc, bhw).astype(jnp.float32)

    smem = pl.BlockSpec(memory_space=pltpu.MemorySpace.SMEM)
    vmem = pl.BlockSpec(memory_space=pltpu.MemorySpace.VMEM)

    x0r_f, loss_sum = pl.pallas_call(
        _make_bbdm_kernel(b, c, cc, hw),
        out_shape=(
            jax.ShapeDtypeStruct((c, bhw), jnp.float32),   # x0_recon (f32, matches ref)
            jax.ShapeDtypeStruct((1, 1), jnp.float32),     # sum |objective - objective_recon|
        ),
        in_specs=[smem, smem, smem, smem, smem, vmem],
        out_specs=(vmem, vmem),
    )(
        t.astype(jnp.int32),
        m_t.astype(jnp.float32),
        sigma_t.astype(jnp.float32),
        temb_flat.astype(jnp.float32),
        w_flat.astype(jnp.float32),
        data,
    )

    recloss = loss_sum[0, 0] / (b * c * h * wd)            # 'l1' mean
    x0_recon = jnp.transpose(x0r_f.reshape(c, b, h, wd), (1, 0, 2, 3))
    log_dict = {"loss": recloss, "x0_recon": x0_recon}
    return recloss, log_dict


# ----------------------------------------------------------------------------- reference (pure JAX)
def reference_forward(x0, y, context, noise, t, m_t, variance_t, temb_table, wx, wc):
    b, c, h, wd = x0.shape
    cc = context.shape[1]
    m = m_t[t][:, None, None, None]
    sig = jnp.sqrt(variance_t[t])[:, None, None, None]
    x_t = (1.0 - m) * x0 + m * y + sig * noise
    objective = m * (y - x0) + sig * noise
    xt_f = x_t.reshape(b, c, h * wd)
    ctx_f = context.reshape(b, cc, h * wd)
    obj_recon = (
        jnp.einsum("oc,bcl->bol", wx, xt_f, precision=jax.lax.Precision.HIGHEST)
        + jnp.einsum("oc,bcl->bol", wc, ctx_f, precision=jax.lax.Precision.HIGHEST)
        + temb_table[t][:, :, None]
    ).reshape(b, c, h, wd)
    x0_recon = x_t - obj_recon
    loss = jnp.mean(jnp.abs(objective - obj_recon))
    return loss, x0_recon


# ----------------------------------------------------------------------------- main
if __name__ == "__main__":
    # config (small, consistent with module): image_size=(16,16), in_channels=4
    B, C, H, W = 2, 4, 16, 16
    C_CTX = 4
    NUM_TIMESTEPS = 50
    MAX_VAR = 1.0

    # register_schedule(): mt_type == 'linear'
    m_t_np = np.linspace(0.001, 0.999, NUM_TIMESTEPS)
    variance_t_np = 2.0 * (m_t_np - m_t_np ** 2) * MAX_VAR
    m_t = jnp.asarray(m_t_np, dtype=jnp.float32)
    variance_t = jnp.asarray(variance_t_np, dtype=jnp.float32)

    key = jax.random.PRNGKey(0)
    kx, ky, kc, kn, kt, kw1, kw2 = jax.random.split(key, 7)

    x = jax.random.normal(kx, (B, C, H, W), dtype=jnp.float32)            # clean lidar latent
    y = jax.random.normal(ky, (B, C, H, W), dtype=jnp.float32)            # noisy lidar latent
    context = jax.random.normal(kc, (B, C_CTX, H, W), dtype=jnp.float32)  # radar latent
    noise = jax.random.normal(kn, (B, C, H, W), dtype=jnp.float32)        # gaussian noise
    t = jax.random.randint(kt, (B,), 0, NUM_TIMESTEPS)                    # torch.randint analogue

    # deterministic surrogate-denoiser parameters
    wx = 0.05 * jax.random.normal(kw1, (C, C), dtype=jnp.float32) + 0.5 * jnp.eye(C, dtype=jnp.float32)
    wc = 0.05 * jax.random.normal(kw2, (C, C_CTX), dtype=jnp.float32)
    # deterministic sinusoidal time-embedding table (T, C)
    pos = np.arange(NUM_TIMESTEPS)[:, None].astype(np.float32)
    freq = (np.arange(C)[None, :].astype(np.float32) + 1.0) * 0.1
    temb_table = jnp.asarray(np.sin(pos * freq), dtype=jnp.float32)

    # ---- hoisted per-call constants (schedule / parameter constants, computed once) ----
    sigma_t = jnp.sqrt(variance_t)                              # (T,)
    w_flat = jnp.concatenate([wx, wc], axis=1).reshape(-1)      # (C*(C+C_CTX),)
    temb_flat = temb_table.reshape(-1)                          # (T*C,)

    fwd = jax.jit(brownian_bridge_forward)
    loss, log_dict = fwd(x, y, context, noise, t, m_t, sigma_t, temb_flat, w_flat)
    jax.block_until_ready((loss, log_dict["x0_recon"]))

    # sanity check against pure-JAX reference (VPU path is exact f32 -> tight tol)
    ref_loss, ref_x0r = reference_forward(
        x, y, context, noise, t, m_t, variance_t, temb_table, wx, wc
    )
    assert np.allclose(np.asarray(loss), np.asarray(ref_loss), rtol=1e-4, atol=1e-4), (
        float(loss), float(ref_loss))
    assert np.allclose(np.asarray(log_dict["x0_recon"]), np.asarray(ref_x0r),
                       rtol=1e-4, atol=1e-4)

    print("KERNEL_OK")
</pallas_src>

<mosaic_0001>
module attributes {stable_mosaic.version = 11 : i64} {
  func.func @bbdm_kernel(%arg0: memref<2xi32, #tpu.memory_space<smem>>, %arg1: memref<50xf32, #tpu.memory_space<smem>>, %arg2: memref<50xf32, #tpu.memory_space<smem>>, %arg3: memref<200xf32, #tpu.memory_space<smem>>, %arg4: memref<32xf32, #tpu.memory_space<smem>>, %arg5: memref<16x512xf32, #tpu.memory_space<vmem>>, %arg6: memref<4x512xf32, #tpu.memory_space<vmem>>, %arg7: memref<1x1xf32, #tpu.memory_space<vmem>>) attributes {dimension_semantics = [], scalar_prefetch = 0 : i64, scratch_operands = 0 : i64, tpu.core_type = #tpu.core_type<tc>} {
    %cst = arith.constant 0.000000e+00 : f32
    %0 = vector.broadcast %cst : f32 to vector<1x1xf32>
    %c0 = arith.constant 0 : index
    %1 = memref.load %arg0[%c0] : memref<2xi32, #tpu.memory_space<smem>>
    %2 = arith.index_cast %1 : i32 to index
    %3 = memref.load %arg1[%2] : memref<50xf32, #tpu.memory_space<smem>>
    %4 = arith.index_cast %1 : i32 to index
    %5 = memref.load %arg2[%4] : memref<50xf32, #tpu.memory_space<smem>>
    %c0_0 = arith.constant 0 : index
    %c0_1 = arith.constant 0 : index
    %6 = vector.load %arg5[%c0_0, %c0_1] : memref<16x512xf32, #tpu.memory_space<vmem>>, vector<4x256xf32>
    %c4 = arith.constant 4 : index
    %c0_2 = arith.constant 0 : index
    %7 = vector.load %arg5[%c4, %c0_2] : memref<16x512xf32, #tpu.memory_space<vmem>>, vector<4x256xf32>
    %c8 = arith.constant 8 : index
    %c0_3 = arith.constant 0 : index
    %8 = vector.load %arg5[%c8, %c0_3] : memref<16x512xf32, #tpu.memory_space<vmem>>, vector<4x256xf32>
    %c12 = arith.constant 12 : index
    %c0_4 = arith.constant 0 : index
    %9 = vector.load %arg5[%c12, %c0_4] : memref<16x512xf32, #tpu.memory_space<vmem>>, vector<4x256xf32>
    %10 = vector.broadcast %5 : f32 to vector<4x256xf32>
    %11 = arith.mulf %10, %8 : vector<4x256xf32>
    %cst_5 = arith.constant 1.000000e+00 : f32
    %12 = arith.subf %cst_5, %3 : f32
    %13 = vector.broadcast %12 : f32 to vector<4x256xf32>
    %14 = arith.mulf %13, %6 : vector<4x256xf32>
    %15 = vector.broadcast %3 : f32 to vector<4x256xf32>
    %16 = arith.mulf %15, %7 : vector<4x256xf32>
    %17 = arith.addf %14, %16 : vector<4x256xf32>
    %18 = arith.addf %17, %11 : vector<4x256xf32>
    %19 = arith.subf %7, %6 : vector<4x256xf32>
    %20 = vector.broadcast %3 : f32 to vector<4x256xf32>
    %21 = arith.mulf %20, %19 : vector<4x256xf32>
    %22 = arith.addf %21, %11 : vector<4x256xf32>
    %c0_6 = arith.constant 0 : index
    %23 = memref.load %arg4[%c0_6] : memref<32xf32, #tpu.memory_space<smem>>
    %24 = vector.extract_strided_slice %18 {offsets = [0, 0], sizes = [1, 256], strides = [1, 1]} : vector<4x256xf32> to vector<1x256xf32>
    %25 = vector.broadcast %23 : f32 to vector<1x256xf32>
    %26 = arith.mulf %25, %24 : vector<1x256xf32>
    %c1 = arith.constant 1 : index
    %27 = memref.load %arg4[%c1] : memref<32xf32, #tpu.memory_space<smem>>
    %28 = vector.extract_strided_slice %18 {offsets = [1, 0], sizes = [1, 256], strides = [1, 1]} : vector<4x256xf32> to vector<1x256xf32>
    %29 = vector.broadcast %27 : f32 to vector<1x256xf32>
    %30 = arith.mulf %29, %28 : vector<1x256xf32>
    %31 = arith.addf %26, %30 : vector<1x256xf32>
    %c2 = arith.constant 2 : index
    %32 = memref.load %arg4[%c2] : memref<32xf32, #tpu.memory_space<smem>>
    %33 = vector.extract_strided_slice %18 {offsets = [2, 0], sizes = [1, 256], strides = [1, 1]} : vector<4x256xf32> to vector<1x256xf32>
    %34 = vector.broadcast %32 : f32 to vector<1x256xf32>
    %35 = arith.mulf %34, %33 : vector<1x256xf32>
    %36 = arith.addf %31, %35 : vector<1x256xf32>
    %c3 = arith.constant 3 : index
    %37 = memref.load %arg4[%c3] : memref<32xf32, #tpu.memory_space<smem>>
    %38 = vector.extract_strided_slice %18 {offsets = [3, 0], sizes = [1, 256], strides = [1, 1]} : vector<4x256xf32> to vector<1x256xf32>
    %39 = vector.broadcast %37 : f32 to vector<1x256xf32>
    %40 = arith.mulf %39, %38 : vector<1x256xf32>
    %41 = arith.addf %36, %40 : vector<1x256xf32>
    %c4_7 = arith.constant 4 : index
    %42 = memref.load %arg4[%c4_7] : memref<32xf32, #tpu.memory_space<smem>>
    %43 = vector.extract_strided_slice %9 {offsets = [0, 0], sizes = [1, 256], strides = [1, 1]} : vector<4x256xf32> to vector<1x256xf32>
    %44 = vector.broadcast %42 : f32 to vector<1x256xf32>
    %45 = arith.mulf %44, %43 : vector<1x256xf32>
    %46 = arith.addf %41, %45 : vector<1x256xf32>
    %c5 = arith.constant 5 : index
    %47 = memref.load %arg4[%c5] : memref<32xf32, #tpu.memory_space<smem>>
    %48 = vector.extract_strided_slice %9 {offsets = [1, 0], sizes = [1, 256], strides = [1, 1]} : vector<4x256xf32> to vector<1x256xf32>
    %49 = vector.broadcast %47 : f32 to vector<1x256xf32>
    %50 = arith.mulf %49, %48 : vector<1x256xf32>
    %51 = arith.addf %46, %50 : vector<1x256xf32>
    %c6 = arith.constant 6 : index
    %52 = memref.load %arg4[%c6] : memref<32xf32, #tpu.memory_space<smem>>
    %53 = vector.extract_strided_slice %9 {offsets = [2, 0], sizes = [1, 256], strides = [1, 1]} : vector<4x256xf32> to vector<1x256xf32>
    %54 = vector.broadcast %52 : f32 to vector<1x256xf32>
    %55 = arith.mulf %54, %53 : vector<1x256xf32>
    %56 = arith.addf %51, %55 : vector<1x256xf32>
    %c7 = arith.constant 7 : index
    %57 = memref.load %arg4[%c7] : memref<32xf32, #tpu.memory_space<smem>>
    %58 = vector.extract_strided_slice %9 {offsets = [3, 0], sizes = [1, 256], strides = [1, 1]} : vector<4x256xf32> to vector<1x256xf32>
    %59 = vector.broadcast %57 : f32 to vector<1x256xf32>
    %60 = arith.mulf %59, %58 : vector<1x256xf32>
    %61 = arith.addf %56, %60 : vector<1x256xf32>
    %c4_i32 = arith.constant 4 : i32
    %62 = arith.muli %1, %c4_i32 : i32
    %c0_i32 = arith.constant 0 : i32
    %63 = arith.addi %62, %c0_i32 : i32
    %64 = arith.index_cast %63 : i32 to index
    %65 = memref.load %arg3[%64] : memref<200xf32, #tpu.memory_space<smem>>
    %66 = vector.broadcast %65 : f32 to vector<1x256xf32>
    %67 = arith.addf %61, %66 : vector<1x256xf32>
    %c8_8 = arith.constant 8 : index
    %68 = memref.load %arg4[%c8_8] : memref<32xf32, #tpu.memory_space<smem>>
    %69 = vector.extract_strided_slice %18 {offsets = [0, 0], sizes = [1, 256], strides = [1, 1]} : vector<4x256xf32> to vector<1x256xf32>
    %70 = vector.broadcast %68 : f32 to vector<1x256xf32>
    %71 = arith.mulf %70, %69 : vector<1x256xf32>
    %c9 = arith.constant 9 : index
    %72 = memref.load %arg4[%c9] : memref<32xf32, #tpu.memory_space<smem>>
    %73 = vector.extract_strided_slice %18 {offsets = [1, 0], sizes = [1, 256], strides = [1, 1]} : vector<4x256xf32> to vector<1x256xf32>
    %74 = vector.broadcast %72 : f32 to vector<1x256xf32>
    %75 = arith.mulf %74, %73 : vector<1x256xf32>
    %76 = arith.addf %71, %75 : vector<1x256xf32>
    %c10 = arith.constant 10 : index
    %77 = memref.load %arg4[%c10] : memref<32xf32, #tpu.memory_space<smem>>
    %78 = vector.extract_strided_slice %18 {offsets = [2, 0], sizes = [1, 256], strides = [1, 1]} : vector<4x256xf32> to vector<1x256xf32>
    %79 = vector.broadcast %77 : f32 to vector<1x256xf32>
    %80 = arith.mulf %79, %78 : vector<1x256xf32>
    %81 = arith.addf %76, %80 : vector<1x256xf32>
    %c11 = arith.constant 11 : index
    %82 = memref.load %arg4[%c11] : memref<32xf32, #tpu.memory_space<smem>>
    %83 = vector.extract_strided_slice %18 {offsets = [3, 0], sizes = [1, 256], strides = [1, 1]} : vector<4x256xf32> to vector<1x256xf32>
    %84 = vector.broadcast %82 : f32 to vector<1x256xf32>
    %85 = arith.mulf %84, %83 : vector<1x256xf32>
    %86 = arith.addf %81, %85 : vector<1x256xf32>
    %c12_9 = arith.constant 12 : index
    %87 = memref.load %arg4[%c12_9] : memref<32xf32, #tpu.memory_space<smem>>
    %88 = vector.extract_strided_slice %9 {offsets = [0, 0], sizes = [1, 256], strides = [1, 1]} : vector<4x256xf32> to vector<1x256xf32>
    %89 = vector.broadcast %87 : f32 to vector<1x256xf32>
    %90 = arith.mulf %89, %88 : vector<1x256xf32>
    %91 = arith.addf %86, %90 : vector<1x256xf32>
    %c13 = arith.constant 13 : index
    %92 = memref.load %arg4[%c13] : memref<32xf32, #tpu.memory_space<smem>>
    %93 = vector.extract_strided_slice %9 {offsets = [1, 0], sizes = [1, 256], strides = [1, 1]} : vector<4x256xf32> to vector<1x256xf32>
    %94 = vector.broadcast %92 : f32 to vector<1x256xf32>
    %95 = arith.mulf %94, %93 : vector<1x256xf32>
    %96 = arith.addf %91, %95 : vector<1x256xf32>
    %c14 = arith.constant 14 : index
    %97 = memref.load %arg4[%c14] : memref<32xf32, #tpu.memory_space<smem>>
    %98 = vector.extract_strided_slice %9 {offsets = [2, 0], sizes = [1, 256], strides = [1, 1]} : vector<4x256xf32> to vector<1x256xf32>
    %99 = vector.broadcast %97 : f32 to vector<1x256xf32>
    %100 = arith.mulf %99, %98 : vector<1x256xf32>
    %101 = arith.addf %96, %100 : vector<1x256xf32>
    %c15 = arith.constant 15 : index
    %102 = memref.load %arg4[%c15] : memref<32xf32, #tpu.memory_space<smem>>
    %103 = vector.extract_strided_slice %9 {offsets = [3, 0], sizes = [1, 256], strides = [1, 1]} : vector<4x256xf32> to vector<1x256xf32>
    %104 = vector.broadcast %102 : f32 to vector<1x256xf32>
    %105 = arith.mulf %104, %103 : vector<1x256xf32>
    %106 = arith.addf %101, %105 : vector<1x256xf32>
    %c4_i32_10 = arith.constant 4 : i32
    %107 = arith.muli %1, %c4_i32_10 : i32
    %c1_i32 = arith.constant 1 : i32
    %108 = arith.addi %107, %c1_i32 : i32
    %109 = arith.index_cast %108 : i32 to index
    %110 = memref.load %arg3[%109] : memref<200xf32, #tpu.memory_space<smem>>
    %111 = vector.broadcast %110 : f32 to vector<1x256xf32>
    %112 = arith.addf %106, %111 : vector<1x256xf32>
    %c16 = arith.constant 16 : index
    %113 = memref.load %arg4[%c16] : memref<32xf32, #tpu.memory_space<smem>>
    %114 = vector.extract_strided_slice %18 {offsets = [0, 0], sizes = [1, 256], strides = [1, 1]} : vector<4x256xf32> to vector<1x256xf32>
    %115 = vector.broadcast %113 : f32 to vector<1x256xf32>
    %116 = arith.mulf %115, %114 : vector<1x256xf32>
    %c17 = arith.constant 17 : index
    %117 = memref.load %arg4[%c17] : memref<32xf32, #tpu.memory_space<smem>>
    %118 = vector.extract_strided_slice %18 {offsets = [1, 0], sizes = [1, 256], strides = [1, 1]} : vector<4x256xf32> to vector<1x256xf32>
    %119 = vector.broadcast %117 : f32 to vector<1x256xf32>
    %120 = arith.mulf %119, %118 : vector<1x256xf32>
    %121 = arith.addf %116, %120 : vector<1x256xf32>
    %c18 = arith.constant 18 : index
    %122 = memref.load %arg4[%c18] : memref<32xf32, #tpu.memory_space<smem>>
    %123 = vector.extract_strided_slice %18 {offsets = [2, 0], sizes = [1, 256], strides = [1, 1]} : vector<4x256xf32> to vector<1x256xf32>
    %124 = vector.broadcast %122 : f32 to vector<1x256xf32>
    %125 = arith.mulf %124, %123 : vector<1x256xf32>
    %126 = arith.addf %121, %125 : vector<1x256xf32>
    %c19 = arith.constant 19 : index
    %127 = memref.load %arg4[%c19] : memref<32xf32, #tpu.memory_space<smem>>
    %128 = vector.extract_strided_slice %18 {offsets = [3, 0], sizes = [1, 256], strides = [1, 1]} : vector<4x256xf32> to vector<1x256xf32>
    %129 = vector.broadcast %127 : f32 to vector<1x256xf32>
    %130 = arith.mulf %129, %128 : vector<1x256xf32>
    %131 = arith.addf %126, %130 : vector<1x256xf32>
    %c20 = arith.constant 20 : index
    %132 = memref.load %arg4[%c20] : memref<32xf32, #tpu.memory_space<smem>>
    %133 = vector.extract_strided_slice %9 {offsets = [0, 0], sizes = [1, 256], strides = [1, 1]} : vector<4x256xf32> to vector<1x256xf32>
    %134 = vector.broadcast %132 : f32 to vector<1x256xf32>
    %135 = arith.mulf %134, %133 : vector<1x256xf32>
    %136 = arith.addf %131, %135 : vector<1x256xf32>
    %c21 = arith.constant 21 : index
    %137 = memref.load %arg4[%c21] : memref<32xf32, #tpu.memory_space<smem>>
    %138 = vector.extract_strided_slice %9 {offsets = [1, 0], sizes = [1, 256], strides = [1, 1]} : vector<4x256xf32> to vector<1x256xf32>
    %139 = vector.broadcast %137 : f32 to vector<1x256xf32>
    %140 = arith.mulf %139, %138 : vector<1x256xf32>
    %141 = arith.addf %136, %140 : vector<1x256xf32>
    %c22 = arith.constant 22 : index
    %142 = memref.load %arg4[%c22] : memref<32xf32, #tpu.memory_space<smem>>
    %143 = vector.extract_strided_slice %9 {offsets = [2, 0], sizes = [1, 256], strides = [1, 1]} : vector<4x256xf32> to vector<1x256xf32>
    %144 = vector.broadcast %142 : f32 to vector<1x256xf32>
    %145 = arith.mulf %144, %143 : vector<1x256xf32>
    %146 = arith.addf %141, %145 : vector<1x256xf32>
    %c23 = arith.constant 23 : index
    %147 = memref.load %arg4[%c23] : memref<32xf32, #tpu.memory_space<smem>>
    %148 = vector.extract_strided_slice %9 {offsets = [3, 0], sizes = [1, 256], strides = [1, 1]} : vector<4x256xf32> to vector<1x256xf32>
    %149 = vector.broadcast %147 : f32 to vector<1x256xf32>
    %150 = arith.mulf %149, %148 : vector<1x256xf32>
    %151 = arith.addf %146, %150 : vector<1x256xf32>
    %c4_i32_11 = arith.constant 4 : i32
    %152 = arith.muli %1, %c4_i32_11 : i32
    %c2_i32 = arith.constant 2 : i32
    %153 = arith.addi %152, %c2_i32 : i32
    %154 = arith.index_cast %153 : i32 to index
    %155 = memref.load %arg3[%154] : memref<200xf32, #tpu.memory_space<smem>>
    %156 = vector.broadcast %155 : f32 to vector<1x256xf32>
    %157 = arith.addf %151, %156 : vector<1x256xf32>
    %c24 = arith.constant 24 : index
    %158 = memref.load %arg4[%c24] : memref<32xf32, #tpu.memory_space<smem>>
    %159 = vector.extract_strided_slice %18 {offsets = [0, 0], sizes = [1, 256], strides = [1, 1]} : vector<4x256xf32> to vector<1x256xf32>
    %160 = vector.broadcast %158 : f32 to vector<1x256xf32>
    %161 = arith.mulf %160, %159 : vector<1x256xf32>
    %c25 = arith.constant 25 : index
    %162 = memref.load %arg4[%c25] : memref<32xf32, #tpu.memory_space<smem>>
    %163 = vector.extract_strided_slice %18 {offsets = [1, 0], sizes = [1, 256], strides = [1, 1]} : vector<4x256xf32> to vector<1x256xf32>
    %164 = vector.broadcast %162 : f32 to vector<1x256xf32>
    %165 = arith.mulf %164, %163 : vector<1x256xf32>
    %166 = arith.addf %161, %165 : vector<1x256xf32>
    %c26 = arith.constant 26 : index
    %167 = memref.load %arg4[%c26] : memref<32xf32, #tpu.memory_space<smem>>
    %168 = vector.extract_strided_slice %18 {offsets = [2, 0], sizes = [1, 256], strides = [1, 1]} : vector<4x256xf32> to vector<1x256xf32>
    %169 = vector.broadcast %167 : f32 to vector<1x256xf32>
    %170 = arith.mulf %169, %168 : vector<1x256xf32>
    %171 = arith.addf %166, %170 : vector<1x256xf32>
    %c27 = arith.constant 27 : index
    %172 = memref.load %arg4[%c27] : memref<32xf32, #tpu.memory_space<smem>>
    %173 = vector.extract_strided_slice %18 {offsets = [3, 0], sizes = [1, 256], strides = [1, 1]} : vector<4x256xf32> to vector<1x256xf32>
    %174 = vector.broadcast %172 : f32 to vector<1x256xf32>
    %175 = arith.mulf %174, %173 : vector<1x256xf32>
    %176 = arith.addf %171, %175 : vector<1x256xf32>
    %c28 = arith.constant 28 : index
    %177 = memref.load %arg4[%c28] : memref<32xf32, #tpu.memory_space<smem>>
    %178 = vector.extract_strided_slice %9 {offsets = [0, 0], sizes = [1, 256], strides = [1, 1]} : vector<4x256xf32> to vector<1x256xf32>
    %179 = vector.broadcast %177 : f32 to vector<1x256xf32>
    %180 = arith.mulf %179, %178 : vector<1x256xf32>
    %181 = arith.addf %176, %180 : vector<1x256xf32>
    %c29 = arith.constant 29 : index
    %182 = memref.load %arg4[%c29] : memref<32xf32, #tpu.memory_space<smem>>
    %183 = vector.extract_strided_slice %9 {offsets = [1, 0], sizes = [1, 256], strides = [1, 1]} : vector<4x256xf32> to vector<1x256xf32>
    %184 = vector.broadcast %182 : f32 to vector<1x256xf32>
    %185 = arith.mulf %184, %183 : vector<1x256xf32>
    %186 = arith.addf %181, %185 : vector<1x256xf32>
    %c30 = arith.constant 30 : index
    %187 = memref.load %arg4[%c30] : memref<32xf32, #tpu.memory_space<smem>>
    %188 = vector.extract_strided_slice %9 {offsets = [2, 0], sizes = [1, 256], strides = [1, 1]} : vector<4x256xf32> to vector<1x256xf32>
    %189 = vector.broadcast %187 : f32 to vector<1x256xf32>
    %190 = arith.mulf %189, %188 : vector<1x256xf32>
    %191 = arith.addf %186, %190 : vector<1x256xf32>
    %c31 = arith.constant 31 : index
    %192 = memref.load %arg4[%c31] : memref<32xf32, #tpu.memory_space<smem>>
    %193 = vector.extract_strided_slice %9 {offsets = [3, 0], sizes = [1, 256], strides = [1, 1]} : vector<4x256xf32> to vector<1x256xf32>
    %194 = vector.broadcast %192 : f32 to vector<1x256xf32>
    %195 = arith.mulf %194, %193 : vector<1x256xf32>
    %196 = arith.addf %191, %195 : vector<1x256xf32>
    %c4_i32_12 = arith.constant 4 : i32
    %197 = arith.muli %1, %c4_i32_12 : i32
    %c3_i32 = arith.constant 3 : i32
    %198 = arith.addi %197, %c3_i32 : i32
    %199 = arith.index_cast %198 : i32 to index
    %200 = memref.load %arg3[%199] : memref<200xf32, #tpu.memory_space<smem>>
    %201 = vector.broadcast %200 : f32 to vector<1x256xf32>
    %202 = arith.addf %196, %201 : vector<1x256xf32>
    %203 = tpu.concatenate %67, %112, %157, %202 in 0 : vector<1x256xf32>, vector<1x256xf32>, vector<1x256xf32>, vector<1x256xf32> -> vector<4x256xf32>
    %204 = arith.subf %18, %203 : vector<4x256xf32>
    %c0_13 = arith.constant 0 : index
    %c0_14 = arith.constant 0 : index
    %205 = vector.load %arg6[%c0_13, %c0_14] : memref<4x512xf32, #tpu.memory_space<vmem>>, vector<4x256xf32>
    tpu.vector_store %arg6[%c0_13, %c0_14], %204 {strides = array<i32>} : memref<4x512xf32, #tpu.memory_space<vmem>>, vector<4x256xf32>,
    %206 = arith.subf %22, %203 : vector<4x256xf32>
    %207 = math.absf %206 : vector<4x256xf32>
    %208 = vector.shape_cast %207 : vector<4x256xf32> to vector<1x4x256xf32>
    %cst_15 = arith.constant dense<0.000000e+00> : vector<1xf32>
    %209 = vector.multi_reduction <add>, %208, %cst_15 [1, 2] : vector<1x4x256xf32> to vector<1xf32>
    %210 = vector.shape_cast %209 : vector<1xf32> to vector<1x1x1xf32>
    %211 = vector.extract %210[0, 0, 0] : f32 from vector<1x1x1xf32>
    %212 = vector.broadcast %211 : f32 to vector<1x1xf32>
    %213 = arith.addf %0, %212 : vector<1x1xf32>
    %c1_16 = arith.constant 1 : index
    %214 = memref.load %arg0[%c1_16] : memref<2xi32, #tpu.memory_space<smem>>
    %215 = arith.index_cast %214 : i32 to index
    %216 = memref.load %arg1[%215] : memref<50xf32, #tpu.memory_space<smem>>
    %217 = arith.index_cast %214 : i32 to index
    %218 = memref.load %arg2[%217] : memref<50xf32, #tpu.memory_space<smem>>
    %c0_17 = arith.constant 0 : index
    %c256 = arith.constant 256 : index
    %219 = vector.load %arg5[%c0_17, %c256] : memref<16x512xf32, #tpu.memory_space<vmem>>, vector<4x256xf32>
    %c4_18 = arith.constant 4 : index
    %c256_19 = arith.constant 256 : index
    %220 = vector.load %arg5[%c4_18, %c256_19] : memref<16x512xf32, #tpu.memory_space<vmem>>, vector<4x256xf32>
    %c8_20 = arith.constant 8 : index
    %c256_21 = arith.constant 256 : index
    %221 = vector.load %arg5[%c8_20, %c256_21] : memref<16x512xf32, #tpu.memory_space<vmem>>, vector<4x256xf32>
    %c12_22 = arith.constant 12 : index
    %c256_23 = arith.constant 256 : index
    %222 = vector.load %arg5[%c12_22, %c256_23] : memref<16x512xf32, #tpu.memory_space<vmem>>, vector<4x256xf32>
    %223 = vector.broadcast %218 : f32 to vector<4x256xf32>
    %224 = arith.mulf %223, %221 : vector<4x256xf32>
    %cst_24 = arith.constant 1.000000e+00 : f32
    %225 = arith.subf %cst_24, %216 : f32
    %226 = vector.broadcast %225 : f32 to vector<4x256xf32>
    %227 = arith.mulf %226, %219 : vector<4x256xf32>
    %228 = vector.broadcast %216 : f32 to vector<4x256xf32>
    %229 = arith.mulf %228, %220 : vector<4x256xf32>
    %230 = arith.addf %227, %229 : vector<4x256xf32>
    %231 = arith.addf %230, %224 : vector<4x256xf32>
    %232 = arith.subf %220, %219 : vector<4x256xf32>
    %233 = vector.broadcast %216 : f32 to vector<4x256xf32>
    %234 = arith.mulf %233, %232 : vector<4x256xf32>
    %235 = arith.addf %234, %224 : vector<4x256xf32>
    %c0_25 = arith.constant 0 : index
    %236 = memref.load %arg4[%c0_25] : memref<32xf32, #tpu.memory_space<smem>>
    %237 = vector.extract_strided_slice %231 {offsets = [0, 0], sizes = [1, 256], strides = [1, 1]} : vector<4x256xf32> to vector<1x256xf32>
    %238 = vector.broadcast %236 : f32 to vector<1x256xf32>
    %239 = arith.mulf %238, %237 : vector<1x256xf32>
    %c1_26 = arith.constant 1 : index
    %240 = memref.load %arg4[%c1_26] : memref<32xf32, #tpu.memory_space<smem>>
    %241 = vector.extract_strided_slice %231 {offsets = [1, 0], sizes = [1, 256], strides = [1, 1]} : vector<4x256xf32> to vector<1x256xf32>
    %242 = vector.broadcast %240 : f32 to vector<1x256xf32>
    %243 = arith.mulf %242, %241 : vector<1x256xf32>
    %244 = arith.addf %239, %243 : vector<1x256xf32>
    %c2_27 = arith.constant 2 : index
    %245 = memref.load %arg4[%c2_27] : memref<32xf32, #tpu.memory_space<smem>>
    %246 = vector.extract_strided_slice %231 {offsets = [2, 0], sizes = [1, 256], strides = [1, 1]} : vector<4x256xf32> to vector<1x256xf32>
    %247 = vector.broadcast %245 : f32 to vector<1x256xf32>
    %248 = arith.mulf %247, %246 : vector<1x256xf32>
    %249 = arith.addf %244, %248 : vector<1x256xf32>
    %c3_28 = arith.constant 3 : index
    %250 = memref.load %arg4[%c3_28] : memref<32xf32, #tpu.memory_space<smem>>
    %251 = vector.extract_strided_slice %231 {offsets = [3, 0], sizes = [1, 256], strides = [1, 1]} : vector<4x256xf32> to vector<1x256xf32>
    %252 = vector.broadcast %250 : f32 to vector<1x256xf32>
    %253 = arith.mulf %252, %251 : vector<1x256xf32>
    %254 = arith.addf %249, %253 : vector<1x256xf32>
    %c4_29 = arith.constant 4 : index
    %255 = memref.load %arg4[%c4_29] : memref<32xf32, #tpu.memory_space<smem>>
    %256 = vector.extract_strided_slice %222 {offsets = [0, 0], sizes = [1, 256], strides = [1, 1]} : vector<4x256xf32> to vector<1x256xf32>
    %257 = vector.broadcast %255 : f32 to vector<1x256xf32>
    %258 = arith.mulf %257, %256 : vector<1x256xf32>
    %259 = arith.addf %254, %258 : vector<1x256xf32>
    %c5_30 = arith.constant 5 : index
    %260 = memref.load %arg4[%c5_30] : memref<32xf32, #tpu.memory_space<smem>>
    %261 = vector.extract_strided_slice %222 {offsets = [1, 0], sizes = [1, 256], strides = [1, 1]} : vector<4x256xf32> to vector<1x256xf32>
    %262 = vector.broadcast %260 : f32 to vector<1x256xf32>
    %263 = arith.mulf %262, %261 : vector<1x256xf32>
    %264 = arith.addf %259, %263 : vector<1x256xf32>
    %c6_31 = arith.constant 6 : index
    %265 = memref.load %arg4[%c6_31] : memref<32xf32, #tpu.memory_space<smem>>
    %266 = vector.extract_strided_slice %222 {offsets = [2, 0], sizes = [1, 256], strides = [1, 1]} : vector<4x256xf32> to vector<1x256xf32>
    %267 = vector.broadcast %265 : f32 to vector<1x256xf32>
    %268 = arith.mulf %267, %266 : vector<1x256xf32>
    %269 = arith.addf %264, %268 : vector<1x256xf32>
    %c7_32 = arith.constant 7 : index
    %270 = memref.load %arg4[%c7_32] : memref<32xf32, #tpu.memory_space<smem>>
    %271 = vector.extract_strided_slice %222 {offsets = [3, 0], sizes = [1, 256], strides = [1, 1]} : vector<4x256xf32> to vector<1x256xf32>
    %272 = vector.broadcast %270 : f32 to vector<1x256xf32>
    %273 = arith.mulf %272, %271 : vector<1x256xf32>
    %274 = arith.addf %269, %273 : vector<1x256xf32>
    %c4_i32_33 = arith.constant 4 : i32
    %275 = arith.muli %214, %c4_i32_33 : i32
    %c0_i32_34 = arith.constant 0 : i32
    %276 = arith.addi %275, %c0_i32_34 : i32
    %277 = arith.index_cast %276 : i32 to index
    %278 = memref.load %arg3[%277] : memref<200xf32, #tpu.memory_space<smem>>
    %279 = vector.broadcast %278 : f32 to vector<1x256xf32>
    %280 = arith.addf %274, %279 : vector<1x256xf32>
    %c8_35 = arith.constant 8 : index
    %281 = memref.load %arg4[%c8_35] : memref<32xf32, #tpu.memory_space<smem>>
    %282 = vector.extract_strided_slice %231 {offsets = [0, 0], sizes = [1, 256], strides = [1, 1]} : vector<4x256xf32> to vector<1x256xf32>
    %283 = vector.broadcast %281 : f32 to vector<1x256xf32>
    %284 = arith.mulf %283, %282 : vector<1x256xf32>
    %c9_36 = arith.constant 9 : index
    %285 = memref.load %arg4[%c9_36] : memref<32xf32, #tpu.memory_space<smem>>
    %286 = vector.extract_strided_slice %231 {offsets = [1, 0], sizes = [1, 256], strides = [1, 1]} : vector<4x256xf32> to vector<1x256xf32>
    %287 = vector.broadcast %285 : f32 to vector<1x256xf32>
    %288 = arith.mulf %287, %286 : vector<1x256xf32>
    %289 = arith.addf %284, %288 : vector<1x256xf32>
    %c10_37 = arith.constant 10 : index
    %290 = memref.load %arg4[%c10_37] : memref<32xf32, #tpu.memory_space<smem>>
    %291 = vector.extract_strided_slice %231 {offsets = [2, 0], sizes = [1, 256], strides = [1, 1]} : vector<4x256xf32> to vector<1x256xf32>
    %292 = vector.broadcast %290 : f32 to vector<1x256xf32>
    %293 = arith.mulf %292, %291 : vector<1x256xf32>
    %294 = arith.addf %289, %293 : vector<1x256xf32>
    %c11_38 = arith.constant 11 : index
    %295 = memref.load %arg4[%c11_38] : memref<32xf32, #tpu.memory_space<smem>>
    %296 = vector.extract_strided_slice %231 {offsets = [3, 0], sizes = [1, 256], strides = [1, 1]} : vector<4x256xf32> to vector<1x256xf32>
    %297 = vector.broadcast %295 : f32 to vector<1x256xf32>
    %298 = arith.mulf %297, %296 : vector<1x256xf32>
    %299 = arith.addf %294, %298 : vector<1x256xf32>
    %c12_39 = arith.constant 12 : index
    %300 = memref.load %arg4[%c12_39] : memref<32xf32, #tpu.memory_space<smem>>
    %301 = vector.extract_strided_slice %222 {offsets = [0, 0], sizes = [1, 256], strides = [1, 1]} : vector<4x256xf32> to vector<1x256xf32>
    %302 = vector.broadcast %300 : f32 to vector<1x256xf32>
    %303 = arith.mulf %302, %301 : vector<1x256xf32>
    %304 = arith.addf %299, %303 : vector<1x256xf32>
    %c13_40 = arith.constant 13 : index
    %305 = memref.load %arg4[%c13_40] : memref<32xf32, #tpu.memory_space<smem>>
    %306 = vector.extract_strided_slice %222 {offsets = [1, 0], sizes = [1, 256], strides = [1, 1]} : vector<4x256xf32> to vector<1x256xf32>
    %307 = vector.broadcast %305 : f32 to vector<1x256xf32>
    %308 = arith.mulf %307, %306 : vector<1x256xf32>
    %309 = arith.addf %304, %308 : vector<1x256xf32>
    %c14_41 = arith.constant 14 : index
    %310 = memref.load %arg4[%c14_41] : memref<32xf32, #tpu.memory_space<smem>>
    %311 = vector.extract_strided_slice %222 {offsets = [2, 0], sizes = [1, 256], strides = [1, 1]} : vector<4x256xf32> to vector<1x256xf32>
    %312 = vector.broadcast %310 : f32 to vector<1x256xf32>
    %313 = arith.mulf %312, %311 : vector<1x256xf32>
    %314 = arith.addf %309, %313 : vector<1x256xf32>
    %c15_42 = arith.constant 15 : index
    %315 = memref.load %arg4[%c15_42] : memref<32xf32, #tpu.memory_space<smem>>
    %316 = vector.extract_strided_slice %222 {offsets = [3, 0], sizes = [1, 256], strides = [1, 1]} : vector<4x256xf32> to vector<1x256xf32>
    %317 = vector.broadcast %315 : f32 to vector<1x256xf32>
    %318 = arith.mulf %317, %316 : vector<1x256xf32>
    %319 = arith.addf %314, %318 : vector<1x256xf32>
    %c4_i32_43 = arith.constant 4 : i32
    %320 = arith.muli %214, %c4_i32_43 : i32
    %c1_i32_44 = arith.constant 1 : i32
    %321 = arith.addi %320, %c1_i32_44 : i32
    %322 = arith.index_cast %321 : i32 to index
    %323 = memref.load %arg3[%322] : memref<200xf32, #tpu.memory_space<smem>>
    %324 = vector.broadcast %323 : f32 to vector<1x256xf32>
    %325 = arith.addf %319, %324 : vector<1x256xf32>
    %c16_45 = arith.constant 16 : index
    %326 = memref.load %arg4[%c16_45] : memref<32xf32, #tpu.memory_space<smem>>
    %327 = vector.extract_strided_slice %231 {offsets = [0, 0], sizes = [1, 256], strides = [1, 1]} : vector<4x256xf32> to vector<1x256xf32>
    %328 = vector.broadcast %326 : f32 to vector<1x256xf32>
    %329 = arith.mulf %328, %327 : vector<1x256xf32>
    %c17_46 = arith.constant 17 : index
    %330 = memref.load %arg4[%c17_46] : memref<32xf32, #tpu.memory_space<smem>>
    %331 = vector.extract_strided_slice %231 {offsets = [1, 0], sizes = [1, 256], strides = [1, 1]} : vector<4x256xf32> to vector<1x256xf32>
    %332 = vector.broadcast %330 : f32 to vector<1x256xf32>
    %333 = arith.mulf %332, %331 : vector<1x256xf32>
    %334 = arith.addf %329, %333 : vector<1x256xf32>
    %c18_47 = arith.constant 18 : index
    %335 = memref.load %arg4[%c18_47] : memref<32xf32, #tpu.memory_space<smem>>
    %336 = vector.extract_strided_slice %231 {offsets = [2, 0], sizes = [1, 256], strides = [1, 1]} : vector<4x256xf32> to vector<1x256xf32>
    %337 = vector.broadcast %335 : f32 to vector<1x256xf32>
    %338 = arith.mulf %337, %336 : vector<1x256xf32>
    %339 = arith.addf %334, %338 : vector<1x256xf32>
    %c19_48 = arith.constant 19 : index
    %340 = memref.load %arg4[%c19_48] : memref<32xf32, #tpu.memory_space<smem>>
    %341 = vector.extract_strided_slice %231 {offsets = [3, 0], sizes = [1, 256], strides = [1, 1]} : vector<4x256xf32> to vector<1x256xf32>
    %342 = vector.broadcast %340 : f32 to vector<1x256xf32>
    %343 = arith.mulf %342, %341 : vector<1x256xf32>
    %344 = arith.addf %339, %343 : vector<1x256xf32>
    %c20_49 = arith.constant 20 : index
    %345 = memref.load %arg4[%c20_49] : memref<32xf32, #tpu.memory_space<smem>>
    %346 = vector.extract_strided_slice %222 {offsets = [0, 0], sizes = [1, 256], strides = [1, 1]} : vector<4x256xf32> to vector<1x256xf32>
    %347 = vector.broadcast %345 : f32 to vector<1x256xf32>
    %348 = arith.mulf %347, %346 : vector<1x256xf32>
    %349 = arith.addf %344, %348 : vector<1x256xf32>
    %c21_50 = arith.constant 21 : index
    %350 = memref.load %arg4[%c21_50] : memref<32xf32, #tpu.memory_space<smem>>
    %351 = vector.extract_strided_slice %222 {offsets = [1, 0], sizes = [1, 256], strides = [1, 1]} : vector<4x256xf32> to vector<1x256xf32>
    %352 = vector.broadcast %350 : f32 to vector<1x256xf32>
    %353 = arith.mulf %352, %351 : vector<1x256xf32>
    %354 = arith.addf %349, %353 : vector<1x256xf32>
    %c22_51 = arith.constant 22 : index
    %355 = memref.load %arg4[%c22_51] : memref<32xf32, #tpu.memory_space<smem>>
    %356 = vector.extract_strided_slice %222 {offsets = [2, 0], sizes = [1, 256], strides = [1, 1]} : vector<4x256xf32> to vector<1x256xf32>
    %357 = vector.broadcast %355 : f32 to vector<1x256xf32>
    %358 = arith.mulf %357, %356 : vector<1x256xf32>
    %359 = arith.addf %354, %358 : vector<1x256xf32>
    %c23_52 = arith.constant 23 : index
    %360 = memref.load %arg4[%c23_52] : memref<32xf32, #tpu.memory_space<smem>>
    %361 = vector.extract_strided_slice %222 {offsets = [3, 0], sizes = [1, 256], strides = [1, 1]} : vector<4x256xf32> to vector<1x256xf32>
    %362 = vector.broadcast %360 : f32 to vector<1x256xf32>
    %363 = arith.mulf %362, %361 : vector<1x256xf32>
    %364 = arith.addf %359, %363 : vector<1x256xf32>
    %c4_i32_53 = arith.constant 4 : i32
    %365 = arith.muli %214, %c4_i32_53 : i32
    %c2_i32_54 = arith.constant 2 : i32
    %366 = arith.addi %365, %c2_i32_54 : i32
    %367 = arith.index_cast %366 : i32 to index
    %368 = memref.load %arg3[%367] : memref<200xf32, #tpu.memory_space<smem>>
    %369 = vector.broadcast %368 : f32 to vector<1x256xf32>
    %370 = arith.addf %364, %369 : vector<1x256xf32>
    %c24_55 = arith.constant 24 : index
    %371 = memref.load %arg4[%c24_55] : memref<32xf32, #tpu.memory_space<smem>>
    %372 = vector.extract_strided_slice %231 {offsets = [0, 0], sizes = [1, 256], strides = [1, 1]} : vector<4x256xf32> to vector<1x256xf32>
    %373 = vector.broadcast %371 : f32 to vector<1x256xf32>
    %374 = arith.mulf %373, %372 : vector<1x256xf32>
    %c25_56 = arith.constant 25 : index
    %375 = memref.load %arg4[%c25_56] : memref<32xf32, #tpu.memory_space<smem>>
    %376 = vector.extract_strided_slice %231 {offsets = [1, 0], sizes = [1, 256], strides = [1, 1]} : vector<4x256xf32> to vector<1x256xf32>
    %377 = vector.broadcast %375 : f32 to vector<1x256xf32>
    %378 = arith.mulf %377, %376 : vector<1x256xf32>
    %379 = arith.addf %374, %378 : vector<1x256xf32>
    %c26_57 = arith.constant 26 : index
    %380 = memref.load %arg4[%c26_57] : memref<32xf32, #tpu.memory_space<smem>>
    %381 = vector.extract_strided_slice %231 {offsets = [2, 0], sizes = [1, 256], strides = [1, 1]} : vector<4x256xf32> to vector<1x256xf32>
    %382 = vector.broadcast %380 : f32 to vector<1x256xf32>
    %383 = arith.mulf %382, %381 : vector<1x256xf32>
    %384 = arith.addf %379, %383 : vector<1x256xf32>
    %c27_58 = arith.constant 27 : index
    %385 = memref.load %arg4[%c27_58] : memref<32xf32, #tpu.memory_space<smem>>
    %386 = vector.extract_strided_slice %231 {offsets = [3, 0], sizes = [1, 256], strides = [1, 1]} : vector<4x256xf32> to vector<1x256xf32>
    %387 = vector.broadcast %385 : f32 to vector<1x256xf32>
    %388 = arith.mulf %387, %386 : vector<1x256xf32>
    %389 = arith.addf %384, %388 : vector<1x256xf32>
    %c28_59 = arith.constant 28 : index
    %390 = memref.load %arg4[%c28_59] : memref<32xf32, #tpu.memory_space<smem>>
    %391 = vector.extract_strided_slice %222 {offsets = [0, 0], sizes = [1, 256], strides = [1, 1]} : vector<4x256xf32> to vector<1x256xf32>
    %392 = vector.broadcast %390 : f32 to vector<1x256xf32>
    %393 = arith.mulf %392, %391 : vector<1x256xf32>
    %394 = arith.addf %389, %393 : vector<1x256xf32>
    %c29_60 = arith.constant 29 : index
    %395 = memref.load %arg4[%c29_60] : memref<32xf32, #tpu.memory_space<smem>>
    %396 = vector.extract_strided_slice %222 {offsets = [1, 0], sizes = [1, 256], strides = [1, 1]} : vector<4x256xf32> to vector<1x256xf32>
    %397 = vector.broadcast %395 : f32 to vector<1x256xf32>
    %398 = arith.mulf %397, %396 : vector<1x256xf32>
    %399 = arith.addf %394, %398 : vector<1x256xf32>
    %c30_61 = arith.constant 30 : index
    %400 = memref.load %arg4[%c30_61] : memref<32xf32, #tpu.memory_space<smem>>
    %401 = vector.extract_strided_slice %222 {offsets = [2, 0], sizes = [1, 256], strides = [1, 1]} : vector<4x256xf32> to vector<1x256xf32>
    %402 = vector.broadcast %400 : f32 to vector<1x256xf32>
    %403 = arith.mulf %402, %401 : vector<1x256xf32>
    %404 = arith.addf %399, %403 : vector<1x256xf32>
    %c31_62 = arith.constant 31 : index
    %405 = memref.load %arg4[%c31_62] : memref<32xf32, #tpu.memory_space<smem>>
    %406 = vector.extract_strided_slice %222 {offsets = [3, 0], sizes = [1, 256], strides = [1, 1]} : vector<4x256xf32> to vector<1x256xf32>
    %407 = vector.broadcast %405 : f32 to vector<1x256xf32>
    %408 = arith.mulf %407, %406 : vector<1x256xf32>
    %409 = arith.addf %404, %408 : vector<1x256xf32>
    %c4_i32_63 = arith.constant 4 : i32
    %410 = arith.muli %214, %c4_i32_63 : i32
    %c3_i32_64 = arith.constant 3 : i32
    %411 = arith.addi %410, %c3_i32_64 : i32
    %412 = arith.index_cast %411 : i32 to index
    %413 = memref.load %arg3[%412] : memref<200xf32, #tpu.memory_space<smem>>
    %414 = vector.broadcast %413 : f32 to vector<1x256xf32>
    %415 = arith.addf %409, %414 : vector<1x256xf32>
    %416 = tpu.concatenate %280, %325, %370, %415 in 0 : vector<1x256xf32>, vector<1x256xf32>, vector<1x256xf32>, vector<1x256xf32> -> vector<4x256xf32>
    %417 = arith.subf %231, %416 : vector<4x256xf32>
    %c0_65 = arith.constant 0 : index
    %c256_66 = arith.constant 256 : index
    %418 = vector.load %arg6[%c0_65, %c256_66] : memref<4x512xf32, #tpu.memory_space<vmem>>, vector<4x256xf32>
    tpu.vector_store %arg6[%c0_65, %c256_66], %417 {strides = array<i32>} : memref<4x512xf32, #tpu.memory_space<vmem>>, vector<4x256xf32>,
    %419 = arith.subf %235, %416 : vector<4x256xf32>
    %420 = math.absf %419 : vector<4x256xf32>
    %421 = vector.shape_cast %420 : vector<4x256xf32> to vector<1x4x256xf32>
    %cst_67 = arith.constant dense<0.000000e+00> : vector<1xf32>
    %422 = vector.multi_reduction <add>, %421, %cst_67 [1, 2] : vector<1x4x256xf32> to vector<1xf32>
    %423 = vector.shape_cast %422 : vector<1xf32> to vector<1x1x1xf32>
    %424 = vector.extract %423[0, 0, 0] : f32 from vector<1x1x1xf32>
    %425 = vector.broadcast %424 : f32 to vector<1x1xf32>
    %426 = arith.addf %213, %425 : vector<1x1xf32>
    %c0_68 = arith.constant 0 : index
    %c0_69 = arith.constant 0 : index
    %427 = vector.load %arg7[%c0_68, %c0_69] : memref<1x1xf32, #tpu.memory_space<vmem>>, vector<1x1xf32>
    tpu.vector_store %arg7[%c0_68, %c0_69], %426 {strides = array<i32>} : memref<1x1xf32, #tpu.memory_space<vmem>>, vector<1x1xf32>,
    return
  }
}

</mosaic_0001>

<llo_original>
// kernel: brownian_bridge_forward.1
$region0: #{brownian_bridge_forward.1}
  #allocation0 [shape = 'u32[]', space=smem, size = 0x4, offset = 0x4, fixed_abs, tag = 'smem constant byte address 0x4 - core index']
  #allocation1 [shape = 'u32[144,128]{1,0:T(1,128)}', space=vmem, size = 0x12000, scoped, tag = 'internal scratch']
  %s0 = inlined_call_operand.vmem [shape: s32[2], index: 0, kind: input, shape index: {}]
  %s1 = inlined_call_operand.vmem [shape: f32[50], index: 1, kind: input, shape index: {}]
  %s2 = inlined_call_operand.vmem [shape: f32[50], index: 2, kind: input, shape index: {}]
  %s3 = inlined_call_operand.vmem [shape: f32[200], index: 3, kind: input, shape index: {}]
  %s4 = inlined_call_operand.vmem [shape: f32[32], index: 4, kind: input, shape index: {}]
  %s5 = inlined_call_operand.vmem [shape: f32[16,512], index: 5, kind: input, shape index: {}]
  %s6 = inlined_call_operand.vmem [shape: f32[4,512], index: 6, kind: output, shape index: {0}]
  %s7 = inlined_call_operand.hbm [shape: f32[1,1], index: 7, kind: output, shape index: {1}]
  %8 = xla_tuple %s6, %s7
  %s9 = sld [smem:[#allocation0]]
  $region62: #{brownian_bridge_forward.1} parent=0
    _
  %s11 = ssub.s32 1, %s9
  %s12 = scalar_select 0, %s11, %s9
  $region1: #{brownian_bridge_forward.1} parent=0
    #allocation2 [shape = 'u8[512]{0}', space=smem, size = 0x200, scoped, tag = 'input window, operand 0, single buffered']
    #allocation3 [shape = 's32[1]{0}', space=sflag, size = 0x4, scoped, tag = 'scoped memory for brownian_bridge_forward.1']
    #allocation4 [shape = 's32[1]{0}', space=sflag, size = 0x4, scoped, tag = 'scoped memory for brownian_bridge_forward.1']
    #allocation5 [shape = 'u8[512]{0}', space=smem, size = 0x200, scoped, tag = 'input window, operand 1, single buffered']
    #allocation6 [shape = 's32[1]{0}', space=sflag, size = 0x4, scoped, tag = 'scoped memory for brownian_bridge_forward.1']
    #allocation7 [shape = 'u8[512]{0}', space=smem, size = 0x200, scoped, tag = 'input window, operand 2, single buffered']
    #allocation8 [shape = 'u8[1024]{0}', space=smem, size = 0x400, scoped, tag = 'input window, operand 3, single buffered']
    #allocation9 [shape = 's32[1]{0}', space=sflag, size = 0x4, scoped, tag = 'scoped memory for brownian_bridge_forward.1']
    #allocation10 [shape = 'u8[512]{0}', space=smem, size = 0x200, scoped, tag = 'input window, operand 4, single buffered']
    #allocation11 [shape = 'u8[512]{0}', space=vmem, size = 0x400, scoped, tag = 'output window, operand 1, single buffered']
    %13 = vsyncpa [#allocation4], 0
    %14 = vsyncpa [#allocation6], 0
    %15 = vsyncpa [#allocation9], 0
    %16 = vsyncpa [#allocation3], 0
    // Predicated region
    $region2: #{brownian_bridge_forward.1} parent=1 // pred_check
      _
    $region3: #{brownian_bridge_forward.1} parent=1 // pred_check_branch
      %18 = sbr.rel (0) target = $region5
    $region4: #{brownian_bridge_forward.1} parent=1 // pred_region
      %s20 = ssub.s32 16, 16
      %21 = vsyncadd [#allocation4], %s20
      %s23 = sshll.u32 %s0, 4
      %s24 = int_to_ptr.vmem [resolvable:$true] %s23
      %26 = dma.vmem_to_smem %s24, 16, [#allocation2], [#allocation4]
    $region5: #{brownian_bridge_forward.1} parent=1 // pred_fallthru
      _
    // Predicated region
    $region6: #{brownian_bridge_forward.1} parent=1 // pred_check
      _
    $region7: #{brownian_bridge_forward.1} parent=1 // pred_check_branch
      %28 = sbr.rel (0) target = $region9
    $region8: #{brownian_bridge_forward.1} parent=1 // pred_region
      %s30 = ssub.s32 16, 16
      %31 = vsyncadd [#allocation6], %s30
      %s33 = sshll.u32 %s1, 4
      %s34 = int_to_ptr.vmem [resolvable:$true] %s33
      %36 = dma.vmem_to_smem %s34, 16, [#allocation5], [#allocation6]
    $region9: #{brownian_bridge_forward.1} parent=1 // pred_fallthru
      _
    // Predicated region
    $region10: #{brownian_bridge_forward.1} parent=1 // pred_check
      _
    $region11: #{brownian_bridge_forward.1} parent=1 // pred_check_branch
      %38 = sbr.rel (0) target = $region13
    $region12: #{brownian_bridge_forward.1} parent=1 // pred_region
      %s40 = ssub.s32 16, 16
      %41 = vsyncadd [#allocation6], %s40
      %s43 = sshll.u32 %s2, 4
      %s44 = int_to_ptr.vmem [resolvable:$true] %s43
      %46 = dma.vmem_to_smem %s44, 16, [#allocation7], [#allocation6]
    $region13: #{brownian_bridge_forward.1} parent=1 // pred_fallthru
      _
    // Predicated region
    $region14: #{brownian_bridge_forward.1} parent=1 // pred_check
      _
    $region15: #{brownian_bridge_forward.1} parent=1 // pred_check_branch
      %48 = sbr.rel (0) target = $region17
    $region16: #{brownian_bridge_forward.1} parent=1 // pred_region
      %s50 = ssub.s32 32, 32
      %51 = vsyncadd [#allocation9], %s50
      %s53 = sshll.u32 %s3, 4
      %s54 = int_to_ptr.vmem [resolvable:$true] %s53
      %56 = dma.vmem_to_smem %s54, 32, [#allocation8], [#allocation9]
    $region17: #{brownian_bridge_forward.1} parent=1 // pred_fallthru
      _
    // Predicated region
    $region18: #{brownian_bridge_forward.1} parent=1 // pred_check
      _
    $region19: #{brownian_bridge_forward.1} parent=1 // pred_check_branch
      %58 = sbr.rel (0) target = $region21
    $region20: #{brownian_bridge_forward.1} parent=1 // pred_region
      %s60 = ssub.s32 16, 16
      %61 = vsyncadd [#allocation9], %s60
      %s63 = sshll.u32 %s4, 4
      %s64 = int_to_ptr.vmem [resolvable:$true] %s63
      %66 = dma.vmem_to_smem %s64, 16, [#allocation10], [#allocation9]
    $region21: #{brownian_bridge_forward.1} parent=1 // pred_fallthru
      _
    // Predicated region
    $region22: #{brownian_bridge_forward.1} parent=1 // pred_check
      _
    $region23: #{brownian_bridge_forward.1} parent=1 // pred_check_branch
      %68 = sbr.rel (0) target = $region25
    $region24: #{brownian_bridge_forward.1} parent=1 // pred_region
      _
    $region25: #{brownian_bridge_forward.1} parent=1 // pred_fallthru
      _
    // Predicated region
    $region26: #{brownian_bridge_forward.1} parent=1 // pred_check
      _
    $region27: #{brownian_bridge_forward.1} parent=1 // pred_check_branch
      %70 = sbr.rel (0) target = $region29
    $region28: #{brownian_bridge_forward.1} parent=1 // pred_region
      %71 = dma.done [#allocation4], 16
    $region29: #{brownian_bridge_forward.1} parent=1 // pred_fallthru
      _
    // Predicated region
    $region30: #{brownian_bridge_forward.1} parent=1 // pred_check
      _
    $region31: #{brownian_bridge_forward.1} parent=1 // pred_check_branch
      %73 = sbr.rel (0) target = $region33
    $region32: #{brownian_bridge_forward.1} parent=1 // pred_region
      %74 = dma.done [#allocation6], 16
    $region33: #{brownian_bridge_forward.1} parent=1 // pred_fallthru
      _
    // Predicated region
    $region34: #{brownian_bridge_forward.1} parent=1 // pred_check
      _
    $region35: #{brownian_bridge_forward.1} parent=1 // pred_check_branch
      %76 = sbr.rel (0) target = $region37
    $region36: #{brownian_bridge_forward.1} parent=1 // pred_region
      %77 = dma.done [#allocation6], 16
    $region37: #{brownian_bridge_forward.1} parent=1 // pred_fallthru
      _
    // Predicated region
    $region38: #{brownian_bridge_forward.1} parent=1 // pred_check
      _
    $region39: #{brownian_bridge_forward.1} parent=1 // pred_check_branch
      %79 = sbr.rel (0) target = $region41
    $region40: #{brownian_bridge_forward.1} parent=1 // pred_region
      %80 = dma.done [#allocation9], 32
    $region41: #{brownian_bridge_forward.1} parent=1 // pred_fallthru
      _
    // Predicated region
    $region42: #{brownian_bridge_forward.1} parent=1 // pred_check
      _
    $region43: #{brownian_bridge_forward.1} parent=1 // pred_check_branch
      %82 = sbr.rel (0) target = $region45
    $region44: #{brownian_bridge_forward.1} parent=1 // pred_region
      %83 = dma.done [#allocation9], 16
    $region45: #{brownian_bridge_forward.1} parent=1 // pred_fallthru
      _
    %84 = sfence
    %s85 = sld [smem:[#allocation2]]
    %s86 = sld [smem:[#allocation5 + %s85]]
    %s87 = sld [smem:[#allocation7 + %s85]]
    %v88 = vld [vmem:[%s5] sm:$0xf]
    %v89 = vld [vmem:[%s5 + $0x8] sm:$0xf]
    %v90 = vld [vmem:[%s5] sm:$0xf0]
    %v91 = vld [vmem:[%s5 + $0x8] sm:$0xf0]
    %v92 = vld [vmem:[%s5 + $0x20] sm:$0xf]
    %v93 = vld [vmem:[%s5 + $0x28] sm:$0xf]
    %v94 = vld [vmem:[%s5 + $0x20] sm:$0xf0]
    %v95 = vld [vmem:[%s5 + $0x28] sm:$0xf0]
    %v96 = vstv %s87
    %v97 = vmul.f32 %v96, %v92
    %v98 = vmul.f32 %v96, %v93
    %s99 = ssub.f32 1.0, %s86
    %v100 = vstv %s99
    %v101 = vmul.f32 %v100, %v88
    %v102 = vmul.f32 %v100, %v89
    %v103 = vstv %s86
    %v104 = vmul.f32 %v103, %v90
    %v105 = vmul.f32 %v103, %v91
    %v108 = vrot.slane %v104, 4
    %v109 = vrot.slane %v105, 4
    %v112 = vadd.f32 %v101, %v108
    %v113 = vadd.f32 %v102, %v109
    %v114 = vadd.f32 %v112, %v97
    %v115 = vadd.f32 %v113, %v98
    %v118 = vrot.slane %v88, 4
    %v119 = vrot.slane %v89, 4
    %v122 = vsub.f32 %v90, %v118
    %v123 = vsub.f32 %v91, %v119
    %v124 = vmul.f32 %v103, %v122
    %v125 = vmul.f32 %v103, %v123
    %v128 = vrot.slane %v97, 4
    %v129 = vrot.slane %v98, 4
    %v132 = vadd.f32 %v124, %v128
    %v133 = vadd.f32 %v125, %v129
    %s134 = sld [smem:[#allocation10]]
    %v135 = vstv %s134
    %v136 = vmul.f32 %v135, %v114
    %v137 = vmul.f32 %v135, %v115
    %s138 = sld [smem:[#allocation10 + $0x1]]
    %v139 = vstv %s138
    %v140 = vmul.f32 %v139, %v114
    %v141 = vmul.f32 %v139, %v115
    %v144 = vrot.slane %v140, 1
    %v145 = vrot.slane %v141, 1
    %v148 = vadd.f32 %v136, %v144
    %v149 = vadd.f32 %v137, %v145
    %s150 = sld [smem:[#allocation10 + $0x2]]
    %v151 = vstv %s150
    %v152 = vmul.f32 %v151, %v114
    %v153 = vmul.f32 %v151, %v115
    %v156 = vrot.slane %v152, 2
    %v157 = vrot.slane %v153, 2
    %v160 = vadd.f32 %v148, %v156
    %v161 = vadd.f32 %v149, %v157
    %s162 = sld [smem:[#allocation10 + $0x3]]
    %v163 = vstv %s162
    %v164 = vmul.f32 %v163, %v114
    %v165 = vmul.f32 %v163, %v115
    %v168 = vrot.slane %v164, 3
    %v169 = vrot.slane %v165, 3
    %v172 = vadd.f32 %v160, %v168
    %v173 = vadd.f32 %v161, %v169
    %s174 = sld [smem:[#allocation10 + $0x4]]
    %v175 = vstv %s174
    %v176 = vmul.f32 %v175, %v94
    %v177 = vmul.f32 %v175, %v95
    %v180 = vrot.slane %v176, 4
    %v181 = vrot.slane %v177, 4
    %v184 = vadd.f32 %v172, %v180
    %v185 = vadd.f32 %v173, %v181
    %s186 = sld [smem:[#allocation10 + $0x5]]
    %v187 = vstv %s186
    %v188 = vmul.f32 %v187, %v94
    %v189 = vmul.f32 %v187, %v95
    %v192 = vrot.slane %v188, 5
    %v193 = vrot.slane %v189, 5
    %v196 = vadd.f32 %v184, %v192
    %v197 = vadd.f32 %v185, %v193
    %s198 = sld [smem:[#allocation10 + $0x6]]
    %v199 = vstv %s198
    %v200 = vmul.f32 %v199, %v94
    %v201 = vmul.f32 %v199, %v95
    %v204 = vrot.slane %v200, 6
    %v205 = vrot.slane %v201, 6
    %v208 = vadd.f32 %v196, %v204
    %v209 = vadd.f32 %v197, %v205
    %s210 = sld [smem:[#allocation10 + $0x7]]
    %v211 = vstv %s210
    %v212 = vmul.f32 %v211, %v94
    %v213 = vmul.f32 %v211, %v95
    %v216 = vrot.slane %v212, 7
    %v217 = vrot.slane %v213, 7
    %v220 = vadd.f32 %v208, %v216
    %v221 = vadd.f32 %v209, %v217
    %s222 = smul.u32 %s85, 4
    %s223 = sld [smem:[#allocation8 + %s222]]
    %v224 = vstv %s223
    %v225 = vadd.f32 %v220, %v224
    %v226 = vadd.f32 %v221, %v224
    %s227 = sld [smem:[#allocation10 + $0x8]]
    %v228 = vstv %s227
    %v229 = vmul.f32 %v228, %v114
    %v230 = vmul.f32 %v228, %v115
    %s231 = sld [smem:[#allocation10 + $0x9]]
    %v232 = vstv %s231
    %v233 = vmul.f32 %v232, %v114
    %v234 = vmul.f32 %v232, %v115
    %v237 = vrot.slane %v233, 1
    %v238 = vrot.slane %v234, 1
    %v241 = vadd.f32 %v229, %v237
    %v242 = vadd.f32 %v230, %v238
    %s243 = sld [smem:[#allocation10 + $0xa]]
    %v244 = vstv %s243
    %v245 = vmul.f32 %v244, %v114
    %v246 = vmul.f32 %v244, %v115
    %v249 = vrot.slane %v245, 2
    %v250 = vrot.slane %v246, 2
    %v253 = vadd.f32 %v241, %v249
    %v254 = vadd.f32 %v242, %v250
    %s255 = sld [smem:[#allocation10 + $0xb]]
    %v256 = vstv %s255
    %v257 = vmul.f32 %v256, %v114
    %v258 = vmul.f32 %v256, %v115
    %v261 = vrot.slane %v257, 3
    %v262 = vrot.slane %v258, 3
    %v265 = vadd.f32 %v253, %v261
    %v266 = vadd.f32 %v254, %v262
    %s267 = sld [smem:[#allocation10 + $0xc]]
    %v268 = vstv %s267
    %v269 = vmul.f32 %v268, %v94
    %v270 = vmul.f32 %v268, %v95
    %v273 = vrot.slane %v269, 4
    %v274 = vrot.slane %v270, 4
    %v277 = vadd.f32 %v265, %v273
    %v278 = vadd.f32 %v266, %v274
    %s279 = sld [smem:[#allocation10 + $0xd]]
    %v280 = vstv %s279
    %v281 = vmul.f32 %v280, %v94
    %v282 = vmul.f32 %v280, %v95
    %v285 = vrot.slane %v281, 5
    %v286 = vrot.slane %v282, 5
    %v289 = vadd.f32 %v277, %v285
    %v290 = vadd.f32 %v278, %v286
    %s291 = sld [smem:[#allocation10 + $0xe]]
    %v292 = vstv %s291
    %v293 = vmul.f32 %v292, %v94
    %v294 = vmul.f32 %v292, %v95
    %v297 = vrot.slane %v293, 6
    %v298 = vrot.slane %v294, 6
    %v301 = vadd.f32 %v289, %v297
    %v302 = vadd.f32 %v290, %v298
    %s303 = sld [smem:[#allocation10 + $0xf]]
    %v304 = vstv %s303
    %v305 = vmul.f32 %v304, %v94
    %v306 = vmul.f32 %v304, %v95
    %v309 = vrot.slane %v305, 7
    %v310 = vrot.slane %v306, 7
    %v313 = vadd.f32 %v301, %v309
    %v314 = vadd.f32 %v302, %v310
    %s315 = sadd.s32 %s222, 1
    %s316 = sld [smem:[#allocation8 + %s315]]
    %v317 = vstv %s316
    %v318 = vadd.f32 %v313, %v317
    %v319 = vadd.f32 %v314, %v317
    %s320 = sld [smem:[#allocation10 + $0x10]]
    %v321 = vstv %s320
    %v322 = vmul.f32 %v321, %v114
    %v323 = vmul.f32 %v321, %v115
    %s324 = sld [smem:[#allocation10 + $0x11]]
    %v325 = vstv %s324
    %v326 = vmul.f32 %v325, %v114
    %v327 = vmul.f32 %v325, %v115
    %v330 = vrot.slane %v326, 1
    %v331 = vrot.slane %v327, 1
    %v334 = vadd.f32 %v322, %v330
    %v335 = vadd.f32 %v323, %v331
    %s336 = sld [smem:[#allocation10 + $0x12]]
    %v337 = vstv %s336
    %v338 = vmul.f32 %v337, %v114
    %v339 = vmul.f32 %v337, %v115
    %v342 = vrot.slane %v338, 2
    %v343 = vrot.slane %v339, 2
    %v346 = vadd.f32 %v334, %v342
    %v347 = vadd.f32 %v335, %v343
    %s348 = sld [smem:[#allocation10 + $0x13]]
    %v349 = vstv %s348
    %v350 = vmul.f32 %v349, %v114
    %v351 = vmul.f32 %v349, %v115
    %v354 = vrot.slane %v350, 3
    %v355 = vrot.slane %v351, 3
    %v358 = vadd.f32 %v346, %v354
    %v359 = vadd.f32 %v347, %v355
    %s360 = sld [smem:[#allocation10 + $0x14]]
    %v361 = vstv %s360
    %v362 = vmul.f32 %v361, %v94
    %v363 = vmul.f32 %v361, %v95
    %v366 = vrot.slane %v362, 4
    %v367 = vrot.slane %v363, 4
    %v370 = vadd.f32 %v358, %v366
    %v371 = vadd.f32 %v359, %v367
    %s372 = sld [smem:[#allocation10 + $0x15]]
    %v373 = vstv %s372
    %v374 = vmul.f32 %v373, %v94
    %v375 = vmul.f32 %v373, %v95
    %v378 = vrot.slane %v374, 5
    %v379 = vrot.slane %v375, 5
    %v382 = vadd.f32 %v370, %v378
    %v383 = vadd.f32 %v371, %v379
    %s384 = sld [smem:[#allocation10 + $0x16]]
    %v385 = vstv %s384
    %v386 = vmul.f32 %v385, %v94
    %v387 = vmul.f32 %v385, %v95
    %v390 = vrot.slane %v386, 6
    %v391 = vrot.slane %v387, 6
    %v394 = vadd.f32 %v382, %v390
    %v395 = vadd.f32 %v383, %v391
    %s396 = sld [smem:[#allocation10 + $0x17]]
    %v397 = vstv %s396
    %v398 = vmul.f32 %v397, %v94
    %v399 = vmul.f32 %v397, %v95
    %v402 = vrot.slane %v398, 7
    %v403 = vrot.slane %v399, 7
    %v406 = vadd.f32 %v394, %v402
    %v407 = vadd.f32 %v395, %v403
    %s408 = sadd.s32 %s222, 2
    %s409 = sld [smem:[#allocation8 + %s408]]
    %v410 = vstv %s409
    %v411 = vadd.f32 %v406, %v410
    %v412 = vadd.f32 %v407, %v410
    %s413 = sld [smem:[#allocation10 + $0x18]]
    %v414 = vstv %s413
    %v415 = vmul.f32 %v414, %v114
    %v416 = vmul.f32 %v414, %v115
    %s417 = sld [smem:[#allocation10 + $0x19]]
    %v418 = vstv %s417
    %v419 = vmul.f32 %v418, %v114
    %v420 = vmul.f32 %v418, %v115
    %v423 = vrot.slane %v419, 1
    %v424 = vrot.slane %v420, 1
    %v427 = vadd.f32 %v415, %v423
    %v428 = vadd.f32 %v416, %v424
    %s429 = sld [smem:[#allocation10 + $0x1a]]
    %v430 = vstv %s429
    %v431 = vmul.f32 %v430, %v114
    %v432 = vmul.f32 %v430, %v115
    %v435 = vrot.slane %v431, 2
    %v436 = vrot.slane %v432, 2
    %v439 = vadd.f32 %v427, %v435
    %v440 = vadd.f32 %v428, %v436
    %s441 = sld [smem:[#allocation10 + $0x1b]]
    %v442 = vstv %s441
    %v443 = vmul.f32 %v442, %v114
    %v444 = vmul.f32 %v442, %v115
    %v447 = vrot.slane %v443, 3
    %v448 = vrot.slane %v444, 3
    %v451 = vadd.f32 %v439, %v447
    %v452 = vadd.f32 %v440, %v448
    %s453 = sld [smem:[#allocation10 + $0x1c]]
    %v454 = vstv %s453
    %v455 = vmul.f32 %v454, %v94
    %v456 = vmul.f32 %v454, %v95
    %v459 = vrot.slane %v455, 4
    %v460 = vrot.slane %v456, 4
    %v463 = vadd.f32 %v451, %v459
    %v464 = vadd.f32 %v452, %v460
    %s465 = sld [smem:[#allocation10 + $0x1d]]
    %v466 = vstv %s465
    %v467 = vmul.f32 %v466, %v94
    %v468 = vmul.f32 %v466, %v95
    %v471 = vrot.slane %v467, 5
    %v472 = vrot.slane %v468, 5
    %v475 = vadd.f32 %v463, %v471
    %v476 = vadd.f32 %v464, %v472
    %s477 = sld [smem:[#allocation10 + $0x1e]]
    %v478 = vstv %s477
    %v479 = vmul.f32 %v478, %v94
    %v480 = vmul.f32 %v478, %v95
    %v483 = vrot.slane %v479, 6
    %v484 = vrot.slane %v480, 6
    %v487 = vadd.f32 %v475, %v483
    %v488 = vadd.f32 %v476, %v484
    %s489 = sld [smem:[#allocation10 + $0x1f]]
    %v490 = vstv %s489
    %v491 = vmul.f32 %v490, %v94
    %v492 = vmul.f32 %v490, %v95
    %v495 = vrot.slane %v491, 7
    %v496 = vrot.slane %v492, 7
    %v499 = vadd.f32 %v487, %v495
    %v500 = vadd.f32 %v488, %v496
    %s501 = sadd.s32 %s222, 3
    %s502 = sld [smem:[#allocation8 + %s501]]
    %v503 = vstv %s502
    %v504 = vadd.f32 %v499, %v503
    %v505 = vadd.f32 %v500, %v503
    %v508 = vrot.slane %v318, 7
    %v509 = vrot.slane %v319, 7
    %v514 = vrot.slane %v411, 6
    %v515 = vrot.slane %v412, 6
    %v520 = vrot.slane %v504, 5
    %v521 = vrot.slane %v505, 5
    %vm524 = vcmask 1040384
    %v525 = vsel %vm524, %v225, %v508
    %v526 = vsel %vm524, %v226, %v509
    %vm527 = vcmask 1041408
    %v528 = vsel %vm527, %v525, %v514
    %v529 = vsel %vm527, %v526, %v515
    %vm530 = vcmask 1042432
    %v531 = vsel %vm530, %v528, %v520
    %v532 = vsel %vm530, %v529, %v521
    %v533 = vsub.f32 %v114, %v531
    %v534 = vsub.f32 %v115, %v532
    %v537 = vcombine.low %v533, %v534
    %539 = vst [vmem:[%s6] sm:$0xff] %v537
    %v542 = vrot.slane %v531, 4
    %v543 = vrot.slane %v532, 4
    %v546 = vsub.f32 %v132, %v542
    %v547 = vsub.f32 %v133, %v543
    %v548 = vand.u32 2147483647, %v546
    %v549 = vand.u32 2147483647, %v547
    %v552 = vrot.slane %v548, 4
    %v553 = vrot.slane %v549, 4
    %vm556 = vcmask 1043456
    %v557 = vsel %vm556, %v552, 0.0
    %v558 = vsel %vm556, %v553, 0.0
    %v559 = vadd.f32 %v557, %v558
    %560 = vadd.xlane.f32.xlu0 %v559
    %v561 = vpop.xlane.xlu0 %560
    %v562 = vrot.slane %v561, 4
    %v563 = vadd.f32 %v561, %v562
    %v564 = vrot.slane %v563, 2
    %v565 = vadd.f32 %v563, %v564
    %v566 = vrot.slane %v565, 1
    %v567 = vadd.f32 %v565, %v566
    %s568 = vtos %v567
    %v569 = vstv %s568
    %v570 = vadd.f32 %v569, 0.0
    %s571 = sld [smem:[#allocation2 + $0x1]]
    %s572 = sld [smem:[#allocation5 + %s571]]
    %s573 = sld [smem:[#allocation7 + %s571]]
    %v574 = vld [vmem:[%s5 + $0x10] sm:$0xf]
    %v575 = vld [vmem:[%s5 + $0x18] sm:$0xf]
    %v576 = vld [vmem:[%s5 + $0x10] sm:$0xf0]
    %v577 = vld [vmem:[%s5 + $0x18] sm:$0xf0]
    %v578 = vld [vmem:[%s5 + $0x30] sm:$0xf]
    %v579 = vld [vmem:[%s5 + $0x38] sm:$0xf]
    %v580 = vld [vmem:[%s5 + $0x30] sm:$0xf0]
    %v581 = vld [vmem:[%s5 + $0x38] sm:$0xf0]
    %v582 = vstv %s573
    %v583 = vmul.f32 %v582, %v578
    %v584 = vmul.f32 %v582, %v579
    %s585 = ssub.f32 1.0, %s572
    %v586 = vstv %s585
    %v587 = vmul.f32 %v586, %v574
    %v588 = vmul.f32 %v586, %v575
    %v589 = vstv %s572
    %v590 = vmul.f32 %v589, %v576
    %v591 = vmul.f32 %v589, %v577
    %v594 = vrot.slane %v590, 4
    %v595 = vrot.slane %v591, 4
    %v598 = vadd.f32 %v587, %v594
    %v599 = vadd.f32 %v588, %v595
    %v600 = vadd.f32 %v598, %v583
    %v601 = vadd.f32 %v599, %v584
    %v604 = vrot.slane %v574, 4
    %v605 = vrot.slane %v575, 4
    %v608 = vsub.f32 %v576, %v604
    %v609 = vsub.f32 %v577, %v605
    %v610 = vmul.f32 %v589, %v608
    %v611 = vmul.f32 %v589, %v609
    %v614 = vrot.slane %v583, 4
    %v615 = vrot.slane %v584, 4
    %v618 = vadd.f32 %v610, %v614
    %v619 = vadd.f32 %v611, %v615
    %s620 = sld [smem:[#allocation10]]
    %v621 = vstv %s620
    %v622 = vmul.f32 %v621, %v600
    %v623 = vmul.f32 %v621, %v601
    %s624 = sld [smem:[#allocation10 + $0x1]]
    %v625 = vstv %s624
    %v626 = vmul.f32 %v625, %v600
    %v627 = vmul.f32 %v625, %v601
    %v630 = vrot.slane %v626, 1
    %v631 = vrot.slane %v627, 1
    %v634 = vadd.f32 %v622, %v630
    %v635 = vadd.f32 %v623, %v631
    %s636 = sld [smem:[#allocation10 + $0x2]]
    %v637 = vstv %s636
    %v638 = vmul.f32 %v637, %v600
    %v639 = vmul.f32 %v637, %v601
    %v642 = vrot.slane %v638, 2
    %v643 = vrot.slane %v639, 2
    %v646 = vadd.f32 %v634, %v642
    %v647 = vadd.f32 %v635, %v643
    %s648 = sld [smem:[#allocation10 + $0x3]]
    %v649 = vstv %s648
    %v650 = vmul.f32 %v649, %v600
    %v651 = vmul.f32 %v649, %v601
    %v654 = vrot.slane %v650, 3
    %v655 = vrot.slane %v651, 3
    %v658 = vadd.f32 %v646, %v654
    %v659 = vadd.f32 %v647, %v655
    %s660 = sld [smem:[#allocation10 + $0x4]]
    %v661 = vstv %s660
    %v662 = vmul.f32 %v661, %v580
    %v663 = vmul.f32 %v661, %v581
    %v666 = vrot.slane %v662, 4
    %v667 = vrot.slane %v663, 4
    %v670 = vadd.f32 %v658, %v666
    %v671 = vadd.f32 %v659, %v667
    %s672 = sld [smem:[#allocation10 + $0x5]]
    %v673 = vstv %s672
    %v674 = vmul.f32 %v673, %v580
    %v675 = vmul.f32 %v673, %v581
    %v678 = vrot.slane %v674, 5
    %v679 = vrot.slane %v675, 5
    %v682 = vadd.f32 %v670, %v678
    %v683 = vadd.f32 %v671, %v679
    %s684 = sld [smem:[#allocation10 + $0x6]]
    %v685 = vstv %s684
    %v686 = vmul.f32 %v685, %v580
    %v687 = vmul.f32 %v685, %v581
    %v690 = vrot.slane %v686, 6
    %v691 = vrot.slane %v687, 6
    %v694 = vadd.f32 %v682, %v690
    %v695 = vadd.f32 %v683, %v691
    %s696 = sld [smem:[#allocation10 + $0x7]]
    %v697 = vstv %s696
    %v698 = vmul.f32 %v697, %v580
    %v699 = vmul.f32 %v697, %v581
    %v702 = vrot.slane %v698, 7
    %v703 = vrot.slane %v699, 7
    %v706 = vadd.f32 %v694, %v702
    %v707 = vadd.f32 %v695, %v703
    %s708 = smul.u32 %s571, 4
    %s709 = sld [smem:[#allocation8 + %s708]]
    %v710 = vstv %s709
    %v711 = vadd.f32 %v706, %v710
    %v712 = vadd.f32 %v707, %v710
    %s713 = sld [smem:[#allocation10 + $0x8]]
    %v714 = vstv %s713
    %v715 = vmul.f32 %v714, %v600
    %v716 = vmul.f32 %v714, %v601
    %s717 = sld [smem:[#allocation10 + $0x9]]
    %v718 = vstv %s717
    %v719 = vmul.f32 %v718, %v600
    %v720 = vmul.f32 %v718, %v601
    %v723 = vrot.slane %v719, 1
    %v724 = vrot.slane %v720, 1
    %v727 = vadd.f32 %v715, %v723
    %v728 = vadd.f32 %v716, %v724
    %s729 = sld [smem:[#allocation10 + $0xa]]
    %v730 = vstv %s729
    %v731 = vmul.f32 %v730, %v600
    %v732 = vmul.f32 %v730, %v601
    %v735 = vrot.slane %v731, 2
    %v736 = vrot.slane %v732, 2
    %v739 = vadd.f32 %v727, %v735
    %v740 = vadd.f32 %v728, %v736
    %s741 = sld [smem:[#allocation10 + $0xb]]
    %v742 = vstv %s741
    %v743 = vmul.f32 %v742, %v600
    %v744 = vmul.f32 %v742, %v601
    %v747 = vrot.slane %v743, 3
    %v748 = vrot.slane %v744, 3
    %v751 = vadd.f32 %v739, %v747
    %v752 = vadd.f32 %v740, %v748
    %s753 = sld [smem:[#allocation10 + $0xc]]
    %v754 = vstv %s753
    %v755 = vmul.f32 %v754, %v580
    %v756 = vmul.f32 %v754, %v581
    %v759 = vrot.slane %v755, 4
    %v760 = vrot.slane %v756, 4
    %v763 = vadd.f32 %v751, %v759
    %v764 = vadd.f32 %v752, %v760
    %s765 = sld [smem:[#allocation10 + $0xd]]
    %v766 = vstv %s765
    %v767 = vmul.f32 %v766, %v580
    %v768 = vmul.f32 %v766, %v581
    %v771 = vrot.slane %v767, 5
    %v772 = vrot.slane %v768, 5
    %v775 = vadd.f32 %v763, %v771
    %v776 = vadd.f32 %v764, %v772
    %s777 = sld [smem:[#allocation10 + $0xe]]
    %v778 = vstv %s777
    %v779 = vmul.f32 %v778, %v580
    %v780 = vmul.f32 %v778, %v581
    %v783 = vrot.slane %v779, 6
    %v784 = vrot.slane %v780, 6
    %v787 = vadd.f32 %v775, %v783
    %v788 = vadd.f32 %v776, %v784
    %s789 = sld [smem:[#allocation10 + $0xf]]
    %v790 = vstv %s789
    %v791 = vmul.f32 %v790, %v580
    %v792 = vmul.f32 %v790, %v581
    %v795 = vrot.slane %v791, 7
    %v796 = vrot.slane %v792, 7
    %v799 = vadd.f32 %v787, %v795
    %v800 = vadd.f32 %v788, %v796
    %s801 = sadd.s32 %s708, 1
    %s802 = sld [smem:[#allocation8 + %s801]]
    %v803 = vstv %s802
    %v804 = vadd.f32 %v799, %v803
    %v805 = vadd.f32 %v800, %v803
    %s806 = sld [smem:[#allocation10 + $0x10]]
    %v807 = vstv %s806
    %v808 = vmul.f32 %v807, %v600
    %v809 = vmul.f32 %v807, %v601
    %s810 = sld [smem:[#allocation10 + $0x11]]
    %v811 = vstv %s810
    %v812 = vmul.f32 %v811, %v600
    %v813 = vmul.f32 %v811, %v601
    %v816 = vrot.slane %v812, 1
    %v817 = vrot.slane %v813, 1
    %v820 = vadd.f32 %v808, %v816
    %v821 = vadd.f32 %v809, %v817
    %s822 = sld [smem:[#allocation10 + $0x12]]
    %v823 = vstv %s822
    %v824 = vmul.f32 %v823, %v600
    %v825 = vmul.f32 %v823, %v601
    %v828 = vrot.slane %v824, 2
    %v829 = vrot.slane %v825, 2
    %v832 = vadd.f32 %v820, %v828
    %v833 = vadd.f32 %v821, %v829
    %s834 = sld [smem:[#allocation10 + $0x13]]
    %v835 = vstv %s834
    %v836 = vmul.f32 %v835, %v600
    %v837 = vmul.f32 %v835, %v601
    %v840 = vrot.slane %v836, 3
    %v841 = vrot.slane %v837, 3
    %v844 = vadd.f32 %v832, %v840
    %v845 = vadd.f32 %v833, %v841
    %s846 = sld [smem:[#allocation10 + $0x14]]
    %v847 = vstv %s846
    %v848 = vmul.f32 %v847, %v580
    %v849 = vmul.f32 %v847, %v581
    %v852 = vrot.slane %v848, 4
    %v853 = vrot.slane %v849, 4
    %v856 = vadd.f32 %v844, %v852
    %v857 = vadd.f32 %v845, %v853
    %s858 = sld [smem:[#allocation10 + $0x15]]
    %v859 = vstv %s858
    %v860 = vmul.f32 %v859, %v580
    %v861 = vmul.f32 %v859, %v581
    %v864 = vrot.slane %v860, 5
    %v865 = vrot.slane %v861, 5
    %v868 = vadd.f32 %v856, %v864
    %v869 = vadd.f32 %v857, %v865
    %s870 = sld [smem:[#allocation10 + $0x16]]
    %v871 = vstv %s870
    %v872 = vmul.f32 %v871, %v580
    %v873 = vmul.f32 %v871, %v581
    %v876 = vrot.slane %v872, 6
    %v877 = vrot.slane %v873, 6
    %v880 = vadd.f32 %v868, %v876
    %v881 = vadd.f32 %v869, %v877
    %s882 = sld [smem:[#allocation10 + $0x17]]
    %v883 = vstv %s882
    %v884 = vmul.f32 %v883, %v580
    %v885 = vmul.f32 %v883, %v581
    %v888 = vrot.slane %v884, 7
    %v889 = vrot.slane %v885, 7
    %v892 = vadd.f32 %v880, %v888
    %v893 = vadd.f32 %v881, %v889
    %s894 = sadd.s32 %s708, 2
    %s895 = sld [smem:[#allocation8 + %s894]]
    %v896 = vstv %s895
    %v897 = vadd.f32 %v892, %v896
    %v898 = vadd.f32 %v893, %v896
    %s899 = sld [smem:[#allocation10 + $0x18]]
    %v900 = vstv %s899
    %v901 = vmul.f32 %v900, %v600
    %v902 = vmul.f32 %v900, %v601
    %s903 = sld [smem:[#allocation10 + $0x19]]
    %v904 = vstv %s903
    %v905 = vmul.f32 %v904, %v600
    %v906 = vmul.f32 %v904, %v601
    %v909 = vrot.slane %v905, 1
    %v910 = vrot.slane %v906, 1
    %v913 = vadd.f32 %v901, %v909
    %v914 = vadd.f32 %v902, %v910
    %s915 = sld [smem:[#allocation10 + $0x1a]]
    %v916 = vstv %s915
    %v917 = vmul.f32 %v916, %v600
    %v918 = vmul.f32 %v916, %v601
    %v921 = vrot.slane %v917, 2
    %v922 = vrot.slane %v918, 2
    %v925 = vadd.f32 %v913, %v921
    %v926 = vadd.f32 %v914, %v922
    %s927 = sld [smem:[#allocation10 + $0x1b]]
    %v928 = vstv %s927
    %v929 = vmul.f32 %v928, %v600
    %v930 = vmul.f32 %v928, %v601
    %v933 = vrot.slane %v929, 3
    %v934 = vrot.slane %v930, 3
    %v937 = vadd.f32 %v925, %v933
    %v938 = vadd.f32 %v926, %v934
    %s939 = sld [smem:[#allocation10 + $0x1c]]
    %v940 = vstv %s939
    %v941 = vmul.f32 %v940, %v580
    %v942 = vmul.f32 %v940, %v581
    %v945 = vrot.slane %v941, 4
    %v946 = vrot.slane %v942, 4
    %v949 = vadd.f32 %v937, %v945
    %v950 = vadd.f32 %v938, %v946
    %s951 = sld [smem:[#allocation10 + $0x1d]]
    %v952 = vstv %s951
    %v953 = vmul.f32 %v952, %v580
    %v954 = vmul.f32 %v952, %v581
    %v957 = vrot.slane %v953, 5
    %v958 = vrot.slane %v954, 5
    %v961 = vadd.f32 %v949, %v957
    %v962 = vadd.f32 %v950, %v958
    %s963 = sld [smem:[#allocation10 + $0x1e]]
    %v964 = vstv %s963
    %v965 = vmul.f32 %v964, %v580
    %v966 = vmul.f32 %v964, %v581
    %v969 = vrot.slane %v965, 6
    %v970 = vrot.slane %v966, 6
    %v973 = vadd.f32 %v961, %v969
    %v974 = vadd.f32 %v962, %v970
    %s975 = sld [smem:[#allocation10 + $0x1f]]
    %v976 = vstv %s975
    %v977 = vmul.f32 %v976, %v580
    %v978 = vmul.f32 %v976, %v581
    %v981 = vrot.slane %v977, 7
    %v982 = vrot.slane %v978, 7
    %v985 = vadd.f32 %v973, %v981
    %v986 = vadd.f32 %v974, %v982
    %s987 = sadd.s32 %s708, 3
    %s988 = sld [smem:[#allocation8 + %s987]]
    %v989 = vstv %s988
    %v990 = vadd.f32 %v985, %v989
    %v991 = vadd.f32 %v986, %v989
    %v994 = vrot.slane %v804, 7
    %v995 = vrot.slane %v805, 7
    %v1000 = vrot.slane %v897, 6
    %v1001 = vrot.slane %v898, 6
    %v1006 = vrot.slane %v990, 5
    %v1007 = vrot.slane %v991, 5
    %v1010 = vsel %vm524, %v711, %v994
    %v1011 = vsel %vm524, %v712, %v995
    %v1012 = vsel %vm527, %v1010, %v1000
    %v1013 = vsel %vm527, %v1011, %v1001
    %v1014 = vsel %vm530, %v1012, %v1006
    %v1015 = vsel %vm530, %v1013, %v1007
    %v1016 = vsub.f32 %v600, %v1014
    %v1017 = vsub.f32 %v601, %v1015
    %v1020 = vcombine.low %v1016, %v1017
    %1022 = vst [vmem:[%s6 + $0x8] sm:$0xff] %v1020
    %v1025 = vrot.slane %v1014, 4
    %v1026 = vrot.slane %v1015, 4
    %v1029 = vsub.f32 %v618, %v1025
    %v1030 = vsub.f32 %v619, %v1026
    %v1031 = vand.u32 2147483647, %v1029
    %v1032 = vand.u32 2147483647, %v1030
    %v1035 = vrot.slane %v1031, 4
    %v1036 = vrot.slane %v1032, 4
    %v1039 = vsel %vm556, %v1035, 0.0
    %v1040 = vsel %vm556, %v1036, 0.0
    %v1041 = vadd.f32 %v1039, %v1040
    %1042 = vadd.xlane.f32.xlu0 %v1041
    %v1043 = vpop.xlane.xlu0 %1042
    %v1044 = vrot.slane %v1043, 4
    %v1045 = vadd.f32 %v1043, %v1044
    %v1046 = vrot.slane %v1045, 2
    %v1047 = vadd.f32 %v1045, %v1046
    %v1048 = vrot.slane %v1047, 1
    %v1049 = vadd.f32 %v1047, %v1048
    %s1050 = vtos %v1049
    %v1051 = vstv %s1050
    %v1052 = vadd.f32 %v570, %v1051
    %vm1053 = vcmask 0
    %1054 = vst.msk [vmem:[#allocation11] sm:$0x1] %vm1053, %v1052
    // Predicated region
    $region46: #{brownian_bridge_forward.1} parent=1 // pred_check
      _
    $region47: #{brownian_bridge_forward.1} parent=1 // pred_check_branch
      %1056 = sbr.rel (0) target = $region49
    $region48: #{brownian_bridge_forward.1} parent=1 // pred_region
      _
    $region49: #{brownian_bridge_forward.1} parent=1 // pred_fallthru
      _
    // Predicated region
    $region50: #{brownian_bridge_forward.1} parent=1 // pred_check
      _
    $region51: #{brownian_bridge_forward.1} parent=1 // pred_check_branch
      %1058 = sbr.rel (0) target = $region53
    $region52: #{brownian_bridge_forward.1} parent=1 // pred_region
      %s1060 = ssub.s32 16, 16
      %1061 = vsyncadd [#allocation3], %s1060
      %s1063 = sshll.u32 [#allocation11], 4
      %s1064 = int_to_ptr.vmem [resolvable:$true] %s1063
      %1066 = dma.vmem_to_hbm [thread:$0]  %s1064, 16, %s7, [#allocation3]
    $region53: #{brownian_bridge_forward.1} parent=1 // pred_fallthru
      _
    // Predicated region
    $region54: #{brownian_bridge_forward.1} parent=1 // pred_check
      _
    $region55: #{brownian_bridge_forward.1} parent=1 // pred_check_branch
      %1068 = sbr.rel (0) target = $region57
    $region56: #{brownian_bridge_forward.1} parent=1 // pred_region
      _
    $region57: #{brownian_bridge_forward.1} parent=1 // pred_fallthru
      _
    // Predicated region
    $region58: #{brownian_bridge_forward.1} parent=1 // pred_check
      _
    $region59: #{brownian_bridge_forward.1} parent=1 // pred_check_branch
      %1070 = sbr.rel (0) target = $region61
    $region60: #{brownian_bridge_forward.1} parent=1 // pred_region
      %1071 = dma.done [#allocation3], 16
    $region61: #{brownian_bridge_forward.1} parent=1 // pred_fallthru
      _
    %1072 = vsyncpa [#allocation3], 1
    %1073 = vsyncpa [#allocation4], 1
    %1074 = vsyncpa [#allocation6], 1
    %1075 = vsyncpa [#allocation9], 1

</llo_original>
